<compile_context>
chip_gen: v7x
topology: tpu7x:2x2x1
jax: 0.10.0
libtpu: 0.0.40
codegen_flags: <defaults>
</compile_context>

<pallas_src>
import functools
import math

import jax
import jax.numpy as jnp
from jax.experimental import pallas as pl
from jax.experimental.pallas import tpu as pltpu


def _round_up(x: int, m: int) -> int:
    return ((x + m - 1) // m) * m


def _vmem_capacity_bytes() -> int:
    """Per-TensorCore VMEM capacity; fall back to the smallest (v7x, 64 MiB)."""
    try:
        return int(pltpu.get_tpu_info().vmem_capacity_bytes)
    except Exception:
        return 64 << 20


def _mlp_kernel(*refs, n_layers: int):
    """Fused MLP on one batch tile: chain of (x @ Wt) + ReLU, VMEM-resident.

    bf16 operands on the MXU, f32 accumulation, bf16 re-cast between layers.
    """
    x_ref = refs[0]
    w_refs = refs[1:1 + n_layers]
    o_ref = refs[1 + n_layers]

    h = x_ref[...]                                   # bf16 [tile_b, K_pad]
    for li, w_ref in enumerate(w_refs):
        acc = jnp.dot(h, w_ref[...], preferred_element_type=jnp.float32)
        if li != n_layers - 1:
            h = jnp.maximum(acc, 0.0).astype(jnp.bfloat16)
        else:
            h = acc                                   # final layer stays f32
    o_ref[...] = h.astype(o_ref.dtype)


def fused_mlp_forward(x, weights_t_padded, *, tile_b: int, out_dtype=jnp.float32):
    """x: [B, K_pad] bf16; weights_t_padded: list of [K_i, N_i] bf16 (lane-aligned)."""
    B, K_pad = x.shape
    n_layers = len(weights_t_padded)
    N_pad = int(weights_t_padded[-1].shape[1])

    x_itemsize = jnp.dtype(x.dtype).itemsize
    out_itemsize = jnp.dtype(out_dtype).itemsize
    w_bytes = sum(int(w.size) * jnp.dtype(w.dtype).itemsize for w in weights_t_padded)
    max_w = max(int(w.shape[1]) for w in weights_t_padded)

    cap = _vmem_capacity_bytes()
    # Double-buffered x/out tiles + (conservatively double-buffered) weights
    # + live f32 accumulator and bf16 copy of the widest intermediate.
    vmem_est = (2 * tile_b * K_pad * x_itemsize
                + 2 * tile_b * N_pad * out_itemsize
                + 2 * w_bytes
                + 2 * tile_b * max_w * (4 + x_itemsize))
    vmem_limit = int(min(max(vmem_est + (4 << 20), 32 << 20), cap - (8 << 20)))

    flops = 2 * B * sum(int(w.shape[0]) * int(w.shape[1]) for w in weights_t_padded)
    bytes_accessed = int(B * K_pad * x_itemsize + w_bytes + B * N_pad * out_itemsize)
    cost = pl.CostEstimate(flops=flops, transcendentals=0,
                           bytes_accessed=bytes_accessed)

    kernel = functools.partial(_mlp_kernel, n_layers=n_layers)
    grid = (pl.cdiv(B, tile_b),)   # ragged last block handled by Pallas

    def run(single_buffer_weights: bool):
        in_specs = [pl.BlockSpec((tile_b, K_pad), lambda i: (i, 0))]
        for w in weights_t_padded:
            # Constant block index => weight stays VMEM-resident across tiles;
            # single-buffer it to halve its footprint.
            if single_buffer_weights:
                spec = pl.BlockSpec(w.shape, lambda i: (0, 0),
                                    pipeline_mode=pl.Buffered(1))
            else:
                spec = pl.BlockSpec(w.shape, lambda i: (0, 0))
            in_specs.append(spec)
        out_specs = pl.BlockSpec((tile_b, N_pad), lambda i: (i, 0))

        call = pl.pallas_call(
            kernel,
            out_shape=jax.ShapeDtypeStruct((B, N_pad), out_dtype),
            grid=grid,
            in_specs=in_specs,
            out_specs=out_specs,
            compiler_params=pltpu.CompilerParams(
                dimension_semantics=("parallel",),
                vmem_limit_bytes=vmem_limit,
            ),
            cost_estimate=cost,
        )
        return call(x, *weights_t_padded)

    try:
        return jax.block_until_ready(run(single_buffer_weights=True))
    except Exception:
        # Fallback if pipeline_mode=pl.Buffered(1) is not accepted.
        return jax.block_until_ready(run(single_buffer_weights=False))


class FullyConnectedPallas:
    """JAX/Pallas re-implementation of explib FullyConnected (bias-free MLP)."""

    _GRANULE = 16          # bf16 sublane packing for the batch-tiled x block
    _MAX_TILE_B_BIG = 1024  # v5e / v6e (128 MiB VMEM)
    _MAX_TILE_B_SMALL = 512  # v7x (64 MiB VMEM)

    def __init__(self, input_dim=3 * 32 * 32, width=100, depth=3,
                 num_classes=10, key=None):
        self.input_dim = input_dim
        self.width = width
        self.depth = depth
        self.num_classes = num_classes

        if key is None:
            key = jax.random.PRNGKey(0)

        # Lane-aligned (padded) dims for the kernel.
        self.in_p = _round_up(input_dim, 128)
        self.w_p = _round_up(width, 128)
        self.c_p = _round_up(num_classes, 128)

        # Layer shapes follow nn.Linear(out, in) weight convention: (out, in).
        shapes = [(width, input_dim)]
        for _ in range(depth - 2):
            shapes.append((width, width))
        shapes.append((num_classes, width))

        padded_shapes = ([(self.in_p, self.w_p)]
                         + [(self.w_p, self.w_p)] * (depth - 2)
                         + [(self.w_p, self.c_p)])

        # Deterministic init, matching PyTorch's U(-1/sqrt(fan_in), ...) scale.
        # Weights are stored pre-transposed; bf16 copies (padded) feed the
        # kernel so the HBM stream is half-width.
        self.weights_t_bf16 = []     # un-padded, transposed (in, out), bf16
        self.weights_t_padded = []   # zero-padded to (K_pad, N_pad), bf16
        for shp, pshp in zip(shapes, padded_shapes):
            key, sub = jax.random.split(key)
            fan_in = shp[1]
            bound = 1.0 / math.sqrt(fan_in)
            w = jax.random.uniform(sub, shp, dtype=jnp.float32,
                                   minval=-bound, maxval=bound)
            w_t = jnp.transpose(w).astype(jnp.bfloat16)          # (in, out)
            self.weights_t_bf16.append(w_t)
            wp = jnp.zeros(pshp, dtype=jnp.bfloat16)
            wp = wp.at[:w_t.shape[0], :w_t.shape[1]].set(w_t)
            self.weights_t_padded.append(wp)

    def _pick_tile_b(self, B: int) -> int:
        g = self._GRANULE
        if B <= g:
            return max(B, 1)   # single full-dim block (exempt from tiling rule)

        cap = _vmem_capacity_bytes()
        w_bytes = sum(int(w.size) * jnp.dtype(w.dtype).itemsize
                      for w in self.weights_t_padded)
        budget = cap - 2 * w_bytes - (8 << 20)
        max_w = max(self.w_p, self.c_p)
        # Per-row VMEM: double-buffered bf16 x tile + double-buffered f32 out
        # tile + live f32 accumulator / bf16 intermediate (with slack).
        per_row = 2 * self.in_p * 2 + 2 * self.c_p * 4 + 2 * max_w * (4 + 2)
        tile_b = budget // per_row if budget > 0 else g
        hard_cap = (self._MAX_TILE_B_SMALL if cap <= (64 << 20)
                    else self._MAX_TILE_B_BIG)
        tile_b = int(max(g, min(tile_b, hard_cap)))
        tile_b = (tile_b // g) * g
        # Keep blocks within the batch (ragged last block is fine).
        tile_b = min(tile_b, (B // g) * g)
        # Guarantee >= 2 grid steps when possible (megacore / v7x utilization).
        while pl.cdiv(B, tile_b) < 2 and tile_b > g:
            tile_b = max(g, ((tile_b // 2) // g) * g)
        return tile_b

    def __call__(self, x):
        # x: [B, C, H, W] (NCHW) or already [B, input_dim]
        B = x.shape[0]
        x = x.reshape(B, self.input_dim).astype(jnp.bfloat16)

        # Pad the feature dim to a multiple of 128 only if needed (padded
        # weight rows are zero, so padded lanes contribute nothing).
        if self.in_p != self.input_dim:
            x = jnp.pad(x, ((0, 0), (0, self.in_p - self.input_dim)))

        tile_b = self._pick_tile_b(B)
        out_padded = fused_mlp_forward(
            x, self.weights_t_padded, tile_b=tile_b, out_dtype=jnp.float32)

        return out_padded[:B, :self.num_classes]


def _reference_forward(model: FullyConnectedPallas, x):
    """Pure-JAX reference with the same bf16-operand / f32-accumulate chain."""
    B = x.shape[0]
    h = x.reshape(B, model.input_dim).astype(jnp.bfloat16)
    n = len(model.weights_t_bf16)
    for li, w_t in enumerate(model.weights_t_bf16):
        acc = jnp.dot(h, w_t, preferred_element_type=jnp.float32)
        if li != n - 1:
            h = jnp.maximum(acc, 0.0).astype(jnp.bfloat16)
        else:
            h = acc
    return h.astype(jnp.float32)


if __name__ == "__main__":
    # Small, module-consistent shapes: input is 3x16x16 -> input_dim = 768.
    C, H, W = 3, 16, 16
    input_dim = C * H * W
    width = 32
    depth = 3
    num_classes = 10

    key = jax.random.PRNGKey(0)
    key_x, key_x2, key_w = jax.random.split(key, 3)

    model = FullyConnectedPallas(input_dim=input_dim, width=width, depth=depth,
                                 num_classes=num_classes, key=key_w)

    # Case 1: tiny batch (single full-dim block).
    B1 = 2
    x1 = jax.random.normal(key_x, (B1, C, H, W), dtype=jnp.float32)
    out1 = jax.block_until_ready(model(x1))
    ref1 = _reference_forward(model, x1)
    assert out1.shape == (B1, num_classes), out1.shape
    assert jnp.allclose(out1, ref1, atol=2e-2, rtol=2e-2), \
        float(jnp.max(jnp.abs(out1 - ref1)))

    # Case 2: batch that exercises multi-tile grid + ragged last block
    # (no wrapper-side batch padding).
    B2 = 50
    x2 = jax.random.normal(key_x2, (B2, C, H, W), dtype=jnp.float32)
    out2 = jax.block_until_ready(model(x2))
    ref2 = _reference_forward(model, x2)
    assert out2.shape == (B2, num_classes), out2.shape
    assert jnp.allclose(out2, ref2, atol=2e-2, rtol=2e-2), \
        float(jnp.max(jnp.abs(out2 - ref2)))

    print("KERNEL_OK")
</pallas_src>

<mosaic_0001>
module attributes {stable_mosaic.version = 11 : i64} {
  func.func @_mlp_kernel(%arg0: i32, %arg1: memref<2x768xbf16, #tpu.memory_space<vmem>>, %arg2: memref<768x128xbf16, #tpu.memory_space<vmem>>, %arg3: memref<128x128xbf16, #tpu.memory_space<vmem>>, %arg4: memref<128x128xbf16, #tpu.memory_space<vmem>>, %arg5: memref<2x128xf32, #tpu.memory_space<vmem>>) attributes {dimension_semantics = [#tpu.dimension_semantics<parallel>], iteration_bounds = array<i64: 1>, scalar_prefetch = 0 : i64, scratch_operands = 0 : i64, tpu.core_type = #tpu.core_type<tc>, window_params = [{transform_indices = @transform_0, window_bounds = array<i64: 2, 768>}, {pipeline_mode = #tpu.pipeline_mode<synchronous>, transform_indices = @transform_1, window_bounds = array<i64: 768, 128>}, {pipeline_mode = #tpu.pipeline_mode<synchronous>, transform_indices = @transform_2, window_bounds = array<i64: 128, 128>}, {pipeline_mode = #tpu.pipeline_mode<synchronous>, transform_indices = @transform_3, window_bounds = array<i64: 128, 128>}, {transform_indices = @transform_4, window_bounds = array<i64: 2, 128>}]} {
    %c0 = arith.constant 0 : index
    %c0_0 = arith.constant 0 : index
    %0 = vector.load %arg1[%c0, %c0_0] : memref<2x768xbf16, #tpu.memory_space<vmem>>, vector<2x768xbf16>
    %c0_1 = arith.constant 0 : index
    %c0_2 = arith.constant 0 : index
    %1 = vector.load %arg2[%c0_1, %c0_2] : memref<768x128xbf16, #tpu.memory_space<vmem>>, vector<768x128xbf16>
    %cst = arith.constant dense<0.000000e+00> : vector<2x128xf32>
    %2 = tpu.matmul %0, %1, %cst {dimension_numbers = #tpu.dot_dimension_numbers<[1], [0], [0], [1], [0, 0, 1, 1], [], []>} : vector<2x768xbf16>, vector<768x128xbf16>, vector<2x128xf32> -> vector<2x128xf32>
    %cst_3 = arith.constant 0.000000e+00 : f32
    %3 = vector.broadcast %cst_3 : f32 to vector<2x128xf32>
    %4 = arith.maximumf %2, %3 : vector<2x128xf32>
    %5 = arith.truncf %4 : vector<2x128xf32> to vector<2x128xbf16>
    %c0_4 = arith.constant 0 : index
    %c0_5 = arith.constant 0 : index
    %6 = vector.load %arg3[%c0_4, %c0_5] : memref<128x128xbf16, #tpu.memory_space<vmem>>, vector<128x128xbf16>
    %cst_6 = arith.constant dense<0.000000e+00> : vector<2x128xf32>
    %7 = tpu.matmul %5, %6, %cst_6 {dimension_numbers = #tpu.dot_dimension_numbers<[1], [0], [0], [1], [0, 0, 1, 1], [], []>} : vector<2x128xbf16>, vector<128x128xbf16>, vector<2x128xf32> -> vector<2x128xf32>
    %cst_7 = arith.constant 0.000000e+00 : f32
    %8 = vector.broadcast %cst_7 : f32 to vector<2x128xf32>
    %9 = arith.maximumf %7, %8 : vector<2x128xf32>
    %10 = arith.truncf %9 : vector<2x128xf32> to vector<2x128xbf16>
    %c0_8 = arith.constant 0 : index
    %c0_9 = arith.constant 0 : index
    %11 = vector.load %arg4[%c0_8, %c0_9] : memref<128x128xbf16, #tpu.memory_space<vmem>>, vector<128x128xbf16>
    %cst_10 = arith.constant dense<0.000000e+00> : vector<2x128xf32>
    %12 = tpu.matmul %10, %11, %cst_10 {dimension_numbers = #tpu.dot_dimension_numbers<[1], [0], [0], [1], [0, 0, 1, 1], [], []>} : vector<2x128xbf16>, vector<128x128xbf16>, vector<2x128xf32> -> vector<2x128xf32>
    %c0_11 = arith.constant 0 : index
    %c0_12 = arith.constant 0 : index
    %13 = vector.load %arg5[%c0_11, %c0_12] : memref<2x128xf32, #tpu.memory_space<vmem>>, vector<2x128xf32>
    tpu.vector_store %arg5[%c0_11, %c0_12], %12 {strides = array<i32>} : memref<2x128xf32, #tpu.memory_space<vmem>>, vector<2x128xf32>,
    return
  }
  func.func @transform_0(%arg0: i32) -> (i32, i32) {
    %c0_i32 = arith.constant 0 : i32
    %c0_i32_0 = arith.constant 0 : i32
    return %arg0, %c0_i32 : i32, i32
  }
  func.func @transform_1(%arg0: i32) -> (i32, i32) {
    %c0_i32 = arith.constant 0 : i32
    %c0_i32_0 = arith.constant 0 : i32
    %c0_i32_1 = arith.constant 0 : i32
    return %c0_i32, %c0_i32_0 : i32, i32
  }
  func.func @transform_2(%arg0: i32) -> (i32, i32) {
    %c0_i32 = arith.constant 0 : i32
    %c0_i32_0 = arith.constant 0 : i32
    %c0_i32_1 = arith.constant 0 : i32
    return %c0_i32, %c0_i32_0 : i32, i32
  }
  func.func @transform_3(%arg0: i32) -> (i32, i32) {
    %c0_i32 = arith.constant 0 : i32
    %c0_i32_0 = arith.constant 0 : i32
    %c0_i32_1 = arith.constant 0 : i32
    return %c0_i32, %c0_i32_0 : i32, i32
  }
  func.func @transform_4(%arg0: i32) -> (i32, i32) {
    %c0_i32 = arith.constant 0 : i32
    %c0_i32_0 = arith.constant 0 : i32
    return %arg0, %c0_i32 : i32, i32
  }
}

module attributes {stable_mosaic.version = 11 : i64} {
  func.func @_mlp_kernel(%arg0: i32, %arg1: memref<2x768xbf16, #tpu.memory_space<vmem>>, %arg2: memref<768x128xbf16, #tpu.memory_space<vmem>>, %arg3: memref<128x128xbf16, #tpu.memory_space<vmem>>, %arg4: memref<128x128xbf16, #tpu.memory_space<vmem>>, %arg5: memref<2x128xf32, #tpu.memory_space<vmem>>) attributes {dimension_semantics = [#tpu.dimension_semantics<parallel>], iteration_bounds = array<i64: 1>, scalar_prefetch = 0 : i64, scratch_operands = 0 : i64, tpu.core_type = #tpu.core_type<tc>, window_params = [{transform_indices = @transform_0, window_bounds = array<i64: 2, 768>}, {pipeline_mode = #tpu.pipeline_mode<synchronous>, transform_indices = @transform_1, window_bounds = array<i64: 768, 128>}, {pipeline_mode = #tpu.pipeline_mode<synchronous>, transform_indices = @transform_2, window_bounds = array<i64: 128, 128>}, {pipeline_mode = #tpu.pipeline_mode<synchronous>, transform_indices = @transform_3, window_bounds = array<i64: 128, 128>}, {transform_indices = @transform_4, window_bounds = array<i64: 2, 128>}]} {
    %c0 = arith.constant 0 : index
    %c0_0 = arith.constant 0 : index
    %0 = vector.load %arg1[%c0, %c0_0] : memref<2x768xbf16, #tpu.memory_space<vmem>>, vector<2x768xbf16>
    %c0_1 = arith.constant 0 : index
    %c0_2 = arith.constant 0 : index
    %1 = vector.load %arg2[%c0_1, %c0_2] : memref<768x128xbf16, #tpu.memory_space<vmem>>, vector<768x128xbf16>
    %cst = arith.constant dense<0.000000e+00> : vector<2x128xf32>
    %2 = tpu.matmul %0, %1, %cst {dimension_numbers = #tpu.dot_dimension_numbers<[1], [0], [0], [1], [0, 0, 1, 1], [], []>} : vector<2x768xbf16>, vector<768x128xbf16>, vector<2x128xf32> -> vector<2x128xf32>
    %cst_3 = arith.constant 0.000000e+00 : f32
    %3 = vector.broadcast %cst_3 : f32 to vector<2x128xf32>
    %4 = arith.maximumf %2, %3 : vector<2x128xf32>
    %5 = arith.truncf %4 : vector<2x128xf32> to vector<2x128xbf16>
    %c0_4 = arith.constant 0 : index
    %c0_5 = arith.constant 0 : index
    %6 = vector.load %arg3[%c0_4, %c0_5] : memref<128x128xbf16, #tpu.memory_space<vmem>>, vector<128x128xbf16>
    %cst_6 = arith.constant dense<0.000000e+00> : vector<2x128xf32>
    %7 = tpu.matmul %5, %6, %cst_6 {dimension_numbers = #tpu.dot_dimension_numbers<[1], [0], [0], [1], [0, 0, 1, 1], [], []>} : vector<2x128xbf16>, vector<128x128xbf16>, vector<2x128xf32> -> vector<2x128xf32>
    %cst_7 = arith.constant 0.000000e+00 : f32
    %8 = vector.broadcast %cst_7 : f32 to vector<2x128xf32>
    %9 = arith.maximumf %7, %8 : vector<2x128xf32>
    %10 = arith.truncf %9 : vector<2x128xf32> to vector<2x128xbf16>
    %c0_8 = arith.constant 0 : index
    %c0_9 = arith.constant 0 : index
    %11 = vector.load %arg4[%c0_8, %c0_9] : memref<128x128xbf16, #tpu.memory_space<vmem>>, vector<128x128xbf16>
    %cst_10 = arith.constant dense<0.000000e+00> : vector<2x128xf32>
    %12 = tpu.matmul %10, %11, %cst_10 {dimension_numbers = #tpu.dot_dimension_numbers<[1], [0], [0], [1], [0, 0, 1, 1], [], []>} : vector<2x128xbf16>, vector<128x128xbf16>, vector<2x128xf32> -> vector<2x128xf32>
    %c0_11 = arith.constant 0 : index
    %c0_12 = arith.constant 0 : index
    %13 = vector.load %arg5[%c0_11, %c0_12] : memref<2x128xf32, #tpu.memory_space<vmem>>, vector<2x128xf32>
    tpu.vector_store %arg5[%c0_11, %c0_12], %12 {strides = array<i32>} : memref<2x128xf32, #tpu.memory_space<vmem>>, vector<2x128xf32>,
    return
  }
  func.func @transform_0(%arg0: i32) -> (i32, i32) {
    %c0_i32 = arith.constant 0 : i32
    %c0_i32_0 = arith.constant 0 : i32
    return %arg0, %c0_i32 : i32, i32
  }
  func.func @transform_1(%arg0: i32) -> (i32, i32) {
    %c0_i32 = arith.constant 0 : i32
    %c0_i32_0 = arith.constant 0 : i32
    %c0_i32_1 = arith.constant 0 : i32
    return %c0_i32, %c0_i32_0 : i32, i32
  }
  func.func @transform_2(%arg0: i32) -> (i32, i32) {
    %c0_i32 = arith.constant 0 : i32
    %c0_i32_0 = arith.constant 0 : i32
    %c0_i32_1 = arith.constant 0 : i32
    return %c0_i32, %c0_i32_0 : i32, i32
  }
  func.func @transform_3(%arg0: i32) -> (i32, i32) {
    %c0_i32 = arith.constant 0 : i32
    %c0_i32_0 = arith.constant 0 : i32
    %c0_i32_1 = arith.constant 0 : i32
    return %c0_i32, %c0_i32_0 : i32, i32
  }
  func.func @transform_4(%arg0: i32) -> (i32, i32) {
    %c0_i32 = arith.constant 0 : i32
    %c0_i32_0 = arith.constant 0 : i32
    return %arg0, %c0_i32 : i32, i32
  }
}

</mosaic_0001>

<llo_original>
// kernel: tpu_custom_call.1
$region0: #{tpu_custom_call.1}
  #allocation0 [shape = 'u32[]', space=smem, size = 0x4, offset = 0x4, fixed_abs, tag = 'smem constant byte address 0x4 - core index']
  #allocation1 [shape = 'u32[144,128]{1,0:T(1,128)}', space=vmem, size = 0x12000, scoped, tag = 'internal scratch']
  %s0 = inlined_call_operand.hbm [shape: bf16[2,768], index: 0, kind: input, shape index: {}]
  %s1 = inlined_call_operand.hbm [shape: bf16[768,128], index: 1, kind: input, shape index: {}]
  %s2 = inlined_call_operand.hbm [shape: bf16[128,128], index: 2, kind: input, shape index: {}]
  %s3 = inlined_call_operand.hbm [shape: bf16[128,128], index: 3, kind: input, shape index: {}]
  %s4 = inlined_call_operand.hbm [shape: f32[2,128], index: 4, kind: output, shape index: {}]
  %s5 = sld [smem:[#allocation0]]
  $region42: #{tpu_custom_call.1} parent=0
    _
  %s7 = ssub.s32 1, %s5
  %s8 = scalar_select 0, %s7, %s5
  $region1: #{tpu_custom_call.1} parent=0
    #allocation2 [shape = 'u8[3072]{0}', space=vmem, size = 0xc00, scoped, tag = 'input window, operand 0, single buffered']
    #allocation3 [shape = 's32[1]{0}', space=sflag, size = 0x4, scoped, tag = 'scoped memory for tpu_custom_call.1']
    #allocation4 [shape = 's32[1]{0}', space=sflag, size = 0x4, scoped, tag = 'scoped memory for tpu_custom_call.1']
    #allocation5 [shape = 'u8[196608]{0}', space=vmem, size = 0x30000, scoped, tag = 'input window, operand 1, single buffered']
    #allocation6 [shape = 's32[1]{0}', space=sflag, size = 0x4, scoped, tag = 'scoped memory for tpu_custom_call.1']
    #allocation7 [shape = 'u8[32768]{0}', space=vmem, size = 0x8000, scoped, tag = 'input window, operand 2, single buffered']
    #allocation8 [shape = 'u8[32768]{0}', space=vmem, size = 0x8000, scoped, tag = 'input window, operand 3, single buffered']
    #allocation9 [shape = 's32[1]{0}', space=sflag, size = 0x4, scoped, tag = 'scoped memory for tpu_custom_call.1']
    #allocation10 [shape = 'u8[1024]{0}', space=vmem, size = 0x400, scoped, tag = 'output window, operand 0, single buffered']
    %9 = vsyncpa [#allocation3], 0
    %10 = vsyncpa [#allocation6], 0
    %11 = vsyncpa [#allocation9], 0
    %12 = vsyncpa [#allocation4], 0
    // Predicated region
    $region2: #{tpu_custom_call.1} parent=1 // pred_check
      _
    $region3: #{tpu_custom_call.1} parent=1 // pred_check_branch
      %14 = sbr.rel (0) target = $region5
    $region4: #{tpu_custom_call.1} parent=1 // pred_region
      %s16 = ssub.s32 96, 96
      %17 = vsyncadd [#allocation3], %s16
      %s19 = sshll.u32 [#allocation2], 4
      %s20 = int_to_ptr.vmem [resolvable:$true] %s19
      %22 = dma.hbm_to_vmem [thread:$0]  %s0, 96, %s20, [#allocation3]
    $region5: #{tpu_custom_call.1} parent=1 // pred_fallthru
      _
    // Predicated region
    $region6: #{tpu_custom_call.1} parent=1 // pred_check
      _
    $region7: #{tpu_custom_call.1} parent=1 // pred_check_branch
      %24 = sbr.rel (0) target = $region9
    $region8: #{tpu_custom_call.1} parent=1 // pred_region
      %s26 = ssub.s32 6144, 6144
      %27 = vsyncadd [#allocation6], %s26
      %s28 = sshll.u32 [#allocation5], 4
      %s29 = int_to_ptr.vmem [resolvable:$true] %s28
      %34 = dma.hbm_to_vmem [thread:$0]  %s1, 6144, %s29, [#allocation6], 64, 64, 4
    $region9: #{tpu_custom_call.1} parent=1 // pred_fallthru
      _
    // Predicated region
    $region10: #{tpu_custom_call.1} parent=1 // pred_check
      _
    $region11: #{tpu_custom_call.1} parent=1 // pred_check_branch
      %36 = sbr.rel (0) target = $region13
    $region12: #{tpu_custom_call.1} parent=1 // pred_region
      %s38 = ssub.s32 1024, 1024
      %39 = vsyncadd [#allocation6], %s38
      %s40 = sshll.u32 [#allocation7], 4
      %s41 = int_to_ptr.vmem [resolvable:$true] %s40
      %46 = dma.hbm_to_vmem [thread:$0]  %s2, 1024, %s41, [#allocation6], 64, 64, 4
    $region13: #{tpu_custom_call.1} parent=1 // pred_fallthru
      _
    // Predicated region
    $region14: #{tpu_custom_call.1} parent=1 // pred_check
      _
    $region15: #{tpu_custom_call.1} parent=1 // pred_check_branch
      %48 = sbr.rel (0) target = $region17
    $region16: #{tpu_custom_call.1} parent=1 // pred_region
      %s50 = ssub.s32 1024, 1024
      %51 = vsyncadd [#allocation9], %s50
      %s52 = sshll.u32 [#allocation8], 4
      %s53 = int_to_ptr.vmem [resolvable:$true] %s52
      %58 = dma.hbm_to_vmem [thread:$0]  %s3, 1024, %s53, [#allocation9], 64, 64, 4
    $region17: #{tpu_custom_call.1} parent=1 // pred_fallthru
      _
    // Predicated region
    $region18: #{tpu_custom_call.1} parent=1 // pred_check
      _
    $region19: #{tpu_custom_call.1} parent=1 // pred_check_branch
      %60 = sbr.rel (0) target = $region21
    $region20: #{tpu_custom_call.1} parent=1 // pred_region
      %61 = dma.done [#allocation3], 96
    $region21: #{tpu_custom_call.1} parent=1 // pred_fallthru
      _
    // Predicated region
    $region22: #{tpu_custom_call.1} parent=1 // pred_check
      _
    $region23: #{tpu_custom_call.1} parent=1 // pred_check_branch
      %63 = sbr.rel (0) target = $region25
    $region24: #{tpu_custom_call.1} parent=1 // pred_region
      %64 = dma.done [#allocation6], 6144
    $region25: #{tpu_custom_call.1} parent=1 // pred_fallthru
      _
    // Predicated region
    $region26: #{tpu_custom_call.1} parent=1 // pred_check
      _
    $region27: #{tpu_custom_call.1} parent=1 // pred_check_branch
      %66 = sbr.rel (0) target = $region29
    $region28: #{tpu_custom_call.1} parent=1 // pred_region
      %67 = dma.done [#allocation6], 1024
    $region29: #{tpu_custom_call.1} parent=1 // pred_fallthru
      _
    // Predicated region
    $region30: #{tpu_custom_call.1} parent=1 // pred_check
      _
    $region31: #{tpu_custom_call.1} parent=1 // pred_check_branch
      %69 = sbr.rel (0) target = $region33
    $region32: #{tpu_custom_call.1} parent=1 // pred_region
      %70 = dma.done [#allocation9], 1024
    $region33: #{tpu_custom_call.1} parent=1 // pred_fallthru
      _
    %v72 = vld [vmem:[#allocation2] sm:$0x3f]
    %v73 = vld [vmem:[#allocation5] sm:$0xf]
    %v74 = vld [vmem:[#allocation5 + $0x4] sm:$0xf]
    %v75 = vld [vmem:[#allocation5 + $0x8] sm:$0xf]
    %v76 = vld [vmem:[#allocation5 + $0xc] sm:$0xf]
    %v77 = vld [vmem:[#allocation5 + $0x10] sm:$0xf]
    %v78 = vld [vmem:[#allocation5 + $0x14] sm:$0xf]
    %v79 = vld [vmem:[#allocation5 + $0x18] sm:$0xf]
    %v80 = vld [vmem:[#allocation5 + $0x1c] sm:$0xf]
    %v81 = vld [vmem:[#allocation5 + $0x20] sm:$0xf]
    %v82 = vld [vmem:[#allocation5 + $0x24] sm:$0xf]
    %v83 = vld [vmem:[#allocation5 + $0x28] sm:$0xf]
    %v84 = vld [vmem:[#allocation5 + $0x2c] sm:$0xf]
    %v85 = vld [vmem:[#allocation5 + $0x30] sm:$0xf]
    %v86 = vld [vmem:[#allocation5 + $0x34] sm:$0xf]
    %v87 = vld [vmem:[#allocation5 + $0x38] sm:$0xf]
    %v88 = vld [vmem:[#allocation5 + $0x3c] sm:$0xf]
    %v89 = vld [vmem:[#allocation5 + $0x40] sm:$0xf]
    %v90 = vld [vmem:[#allocation5 + $0x44] sm:$0xf]
    %v91 = vld [vmem:[#allocation5 + $0x48] sm:$0xf]
    %v92 = vld [vmem:[#allocation5 + $0x4c] sm:$0xf]
    %v93 = vld [vmem:[#allocation5 + $0x50] sm:$0xf]
    %v94 = vld [vmem:[#allocation5 + $0x54] sm:$0xf]
    %v95 = vld [vmem:[#allocation5 + $0x58] sm:$0xf]
    %v96 = vld [vmem:[#allocation5 + $0x5c] sm:$0xf]
    %v97 = vld [vmem:[#allocation5 + $0x60] sm:$0xf]
    %v98 = vld [vmem:[#allocation5 + $0x64] sm:$0xf]
    %v99 = vld [vmem:[#allocation5 + $0x68] sm:$0xf]
    %v100 = vld [vmem:[#allocation5 + $0x6c] sm:$0xf]
    %v101 = vld [vmem:[#allocation5 + $0x70] sm:$0xf]
    %v102 = vld [vmem:[#allocation5 + $0x74] sm:$0xf]
    %v103 = vld [vmem:[#allocation5 + $0x78] sm:$0xf]
    %v104 = vld [vmem:[#allocation5 + $0x7c] sm:$0xf]
    %v105 = vld [vmem:[#allocation5 + $0x80] sm:$0xf]
    %v106 = vld [vmem:[#allocation5 + $0x84] sm:$0xf]
    %v107 = vld [vmem:[#allocation5 + $0x88] sm:$0xf]
    %v108 = vld [vmem:[#allocation5 + $0x8c] sm:$0xf]
    %v109 = vld [vmem:[#allocation5 + $0x90] sm:$0xf]
    %v110 = vld [vmem:[#allocation5 + $0x94] sm:$0xf]
    %v111 = vld [vmem:[#allocation5 + $0x98] sm:$0xf]
    %v112 = vld [vmem:[#allocation5 + $0x9c] sm:$0xf]
    %v113 = vld [vmem:[#allocation5 + $0xa0] sm:$0xf]
    %v114 = vld [vmem:[#allocation5 + $0xa4] sm:$0xf]
    %v115 = vld [vmem:[#allocation5 + $0xa8] sm:$0xf]
    %v116 = vld [vmem:[#allocation5 + $0xac] sm:$0xf]
    %v117 = vld [vmem:[#allocation5 + $0xb0] sm:$0xf]
    %v118 = vld [vmem:[#allocation5 + $0xb4] sm:$0xf]
    %v119 = vld [vmem:[#allocation5 + $0xb8] sm:$0xf]
    %v120 = vld [vmem:[#allocation5 + $0xbc] sm:$0xf]
    %v121 = vld [vmem:[#allocation5 + $0xc0] sm:$0xf]
    %v122 = vld [vmem:[#allocation5 + $0xc4] sm:$0xf]
    %v123 = vld [vmem:[#allocation5 + $0xc8] sm:$0xf]
    %v124 = vld [vmem:[#allocation5 + $0xcc] sm:$0xf]
    %v125 = vld [vmem:[#allocation5 + $0xd0] sm:$0xf]
    %v126 = vld [vmem:[#allocation5 + $0xd4] sm:$0xf]
    %v127 = vld [vmem:[#allocation5 + $0xd8] sm:$0xf]
    %v128 = vld [vmem:[#allocation5 + $0xdc] sm:$0xf]
    %v129 = vld [vmem:[#allocation5 + $0xe0] sm:$0xf]
    %v130 = vld [vmem:[#allocation5 + $0xe4] sm:$0xf]
    %v131 = vld [vmem:[#allocation5 + $0xe8] sm:$0xf]
    %v132 = vld [vmem:[#allocation5 + $0xec] sm:$0xf]
    %v133 = vld [vmem:[#allocation5 + $0xf0] sm:$0xf]
    %v134 = vld [vmem:[#allocation5 + $0xf4] sm:$0xf]
    %v135 = vld [vmem:[#allocation5 + $0xf8] sm:$0xf]
    %v136 = vld [vmem:[#allocation5 + $0xfc] sm:$0xf]
    %v137 = vld [vmem:[#allocation5 + $0x100] sm:$0xf]
    %v138 = vld [vmem:[#allocation5 + $0x104] sm:$0xf]
    %v139 = vld [vmem:[#allocation5 + $0x108] sm:$0xf]
    %v140 = vld [vmem:[#allocation5 + $0x10c] sm:$0xf]
    %v141 = vld [vmem:[#allocation5 + $0x110] sm:$0xf]
    %v142 = vld [vmem:[#allocation5 + $0x114] sm:$0xf]
    %v143 = vld [vmem:[#allocation5 + $0x118] sm:$0xf]
    %v144 = vld [vmem:[#allocation5 + $0x11c] sm:$0xf]
    %v145 = vld [vmem:[#allocation5 + $0x120] sm:$0xf]
    %v146 = vld [vmem:[#allocation5 + $0x124] sm:$0xf]
    %v147 = vld [vmem:[#allocation5 + $0x128] sm:$0xf]
    %v148 = vld [vmem:[#allocation5 + $0x12c] sm:$0xf]
    %v149 = vld [vmem:[#allocation5 + $0x130] sm:$0xf]
    %v150 = vld [vmem:[#allocation5 + $0x134] sm:$0xf]
    %v151 = vld [vmem:[#allocation5 + $0x138] sm:$0xf]
    %v152 = vld [vmem:[#allocation5 + $0x13c] sm:$0xf]
    %v153 = vld [vmem:[#allocation5 + $0x140] sm:$0xf]
    %v154 = vld [vmem:[#allocation5 + $0x144] sm:$0xf]
    %v155 = vld [vmem:[#allocation5 + $0x148] sm:$0xf]
    %v156 = vld [vmem:[#allocation5 + $0x14c] sm:$0xf]
    %v157 = vld [vmem:[#allocation5 + $0x150] sm:$0xf]
    %v158 = vld [vmem:[#allocation5 + $0x154] sm:$0xf]
    %v159 = vld [vmem:[#allocation5 + $0x158] sm:$0xf]
    %v160 = vld [vmem:[#allocation5 + $0x15c] sm:$0xf]
    %v161 = vld [vmem:[#allocation5 + $0x160] sm:$0xf]
    %v162 = vld [vmem:[#allocation5 + $0x164] sm:$0xf]
    %v163 = vld [vmem:[#allocation5 + $0x168] sm:$0xf]
    %v164 = vld [vmem:[#allocation5 + $0x16c] sm:$0xf]
    %v165 = vld [vmem:[#allocation5 + $0x170] sm:$0xf]
    %v166 = vld [vmem:[#allocation5 + $0x174] sm:$0xf]
    %v167 = vld [vmem:[#allocation5 + $0x178] sm:$0xf]
    %v168 = vld [vmem:[#allocation5 + $0x17c] sm:$0xf]
    %v170 = vcombine.high %v72, %v72
    %v172 = vunpack.c.l.s4 1966171168
    %v173 = vunpack.c.0.s8 %v172
    %v174 = vlaneseq
    %v175 = vshrl.u32 %v174, 7
    %v176 = vsub.s32 %v173, %v175
    %v177 = vrot.slane %v72, %v176
    %v179 = vunpack.c.l.s4 1966171168
    %v180 = vunpack.c.0.s8 %v179
    %v181 = vlaneseq
    %v182 = vshrl.u32 %v181, 7
    %v183 = vsub.s32 %v180, %v182
    %v184 = vrot.slane %v170, %v183
    %v185 = vcombine.high %v177, %v177
    %v186 = vcombine.high %v184, %v184
    %v188 = vunpack.c.l.s4 1966171168
    %v189 = vunpack.c.0.s8 %v188
    %v190 = vlaneseq
    %v191 = vshrl.u32 %v190, 7
    %v192 = vsub.s32 %v189, %v191
    %v193 = vrot.slane %v177, %v192
    %v195 = vunpack.c.l.s4 1966171168
    %v196 = vunpack.c.0.s8 %v195
    %v197 = vlaneseq
    %v198 = vshrl.u32 %v197, 7
    %v199 = vsub.s32 %v196, %v198
    %v200 = vrot.slane %v184, %v199
    %v202 = vunpack.c.l.s4 1966171168
    %v203 = vunpack.c.0.s8 %v202
    %v204 = vlaneseq
    %v205 = vshrl.u32 %v204, 7
    %v206 = vsub.s32 %v203, %v205
    %v207 = vrot.slane %v185, %v206
    %v209 = vunpack.c.l.s4 1966171168
    %v210 = vunpack.c.0.s8 %v209
    %v211 = vlaneseq
    %v212 = vshrl.u32 %v211, 7
    %v213 = vsub.s32 %v210, %v212
    %v214 = vrot.slane %v186, %v213
    %v215 = vcombine.high %v193, %v193
    %v216 = vcombine.high %v207, %v207
    %v319 = vunpack.c.l.b16 %v73
    %v320 = vunpack.c.l.b16 %v74
    %v321 = vunpack.c.l.b16 %v75
    %v322 = vunpack.c.l.b16 %v76
    %v323 = vunpack.c.l.b16 %v77
    %v324 = vunpack.c.l.b16 %v78
    %v325 = vunpack.c.l.b16 %v79
    %v326 = vunpack.c.l.b16 %v80
    %v327 = vunpack.c.l.b16 %v81
    %v328 = vunpack.c.l.b16 %v82
    %v329 = vunpack.c.l.b16 %v83
    %v330 = vunpack.c.l.b16 %v84
    %v331 = vunpack.c.l.b16 %v85
    %v332 = vunpack.c.l.b16 %v86
    %v333 = vunpack.c.l.b16 %v87
    %v334 = vunpack.c.l.b16 %v88
    %v335 = vunpack.c.l.b16 %v89
    %v336 = vunpack.c.l.b16 %v90
    %v337 = vunpack.c.l.b16 %v91
    %v338 = vunpack.c.l.b16 %v92
    %v339 = vunpack.c.l.b16 %v93
    %v340 = vunpack.c.l.b16 %v94
    %v341 = vunpack.c.l.b16 %v95
    %v342 = vunpack.c.l.b16 %v96
    %v343 = vunpack.c.l.b16 %v97
    %v344 = vunpack.c.l.b16 %v98
    %v345 = vunpack.c.l.b16 %v99
    %v346 = vunpack.c.l.b16 %v100
    %v347 = vunpack.c.l.b16 %v101
    %v348 = vunpack.c.l.b16 %v102
    %v349 = vunpack.c.l.b16 %v103
    %v350 = vunpack.c.l.b16 %v104
    %v351 = vunpack.c.l.b16 %v105
    %v352 = vunpack.c.l.b16 %v106
    %v353 = vunpack.c.l.b16 %v107
    %v354 = vunpack.c.l.b16 %v108
    %v355 = vunpack.c.l.b16 %v109
    %v356 = vunpack.c.l.b16 %v110
    %v357 = vunpack.c.l.b16 %v111
    %v358 = vunpack.c.l.b16 %v112
    %v359 = vunpack.c.l.b16 %v113
    %v360 = vunpack.c.l.b16 %v114
    %v361 = vunpack.c.l.b16 %v115
    %v362 = vunpack.c.l.b16 %v116
    %v363 = vunpack.c.l.b16 %v117
    %v364 = vunpack.c.l.b16 %v118
    %v365 = vunpack.c.l.b16 %v119
    %v366 = vunpack.c.l.b16 %v120
    %v367 = vunpack.c.l.b16 %v121
    %v368 = vunpack.c.l.b16 %v122
    %v369 = vunpack.c.l.b16 %v123
    %v370 = vunpack.c.l.b16 %v124
    %v371 = vunpack.c.l.b16 %v125
    %v372 = vunpack.c.l.b16 %v126
    %v373 = vunpack.c.l.b16 %v127
    %v374 = vunpack.c.l.b16 %v128
    %v375 = vunpack.c.l.b16 %v129
    %v376 = vunpack.c.l.b16 %v130
    %v377 = vunpack.c.l.b16 %v131
    %v378 = vunpack.c.l.b16 %v132
    %v379 = vunpack.c.l.b16 %v133
    %v380 = vunpack.c.l.b16 %v134
    %v381 = vunpack.c.l.b16 %v135
    %v382 = vunpack.c.l.b16 %v136
    %v383 = vunpack.c.l.b16 %v137
    %v384 = vunpack.c.l.b16 %v138
    %v385 = vunpack.c.l.b16 %v139
    %v386 = vunpack.c.l.b16 %v140
    %v387 = vunpack.c.l.b16 %v141
    %v388 = vunpack.c.l.b16 %v142
    %v389 = vunpack.c.l.b16 %v143
    %v390 = vunpack.c.l.b16 %v144
    %v391 = vunpack.c.l.b16 %v145
    %v392 = vunpack.c.l.b16 %v146
    %v393 = vunpack.c.l.b16 %v147
    %v394 = vunpack.c.l.b16 %v148
    %v395 = vunpack.c.l.b16 %v149
    %v396 = vunpack.c.l.b16 %v150
    %v397 = vunpack.c.l.b16 %v151
    %v398 = vunpack.c.l.b16 %v152
    %v399 = vunpack.c.l.b16 %v153
    %v400 = vunpack.c.l.b16 %v154
    %v401 = vunpack.c.l.b16 %v155
    %v402 = vunpack.c.l.b16 %v156
    %v403 = vunpack.c.l.b16 %v157
    %v404 = vunpack.c.l.b16 %v158
    %v405 = vunpack.c.l.b16 %v159
    %v406 = vunpack.c.l.b16 %v160
    %v407 = vunpack.c.l.b16 %v161
    %v408 = vunpack.c.l.b16 %v162
    %v409 = vunpack.c.l.b16 %v163
    %v410 = vunpack.c.l.b16 %v164
    %v411 = vunpack.c.l.b16 %v165
    %v412 = vunpack.c.l.b16 %v166
    %v413 = vunpack.c.l.b16 %v167
    %v414 = vunpack.c.l.b16 %v168
    %v415 = vpack.c.b16 %v320, %v319
    %v416 = vpack.c.b16 %v322, %v321
    %v417 = vpack.c.b16 %v324, %v323
    %v418 = vpack.c.b16 %v326, %v325
    %v419 = vpack.c.b16 %v328, %v327
    %v420 = vpack.c.b16 %v330, %v329
    %v421 = vpack.c.b16 %v332, %v331
    %v422 = vpack.c.b16 %v334, %v333
    %v423 = vpack.c.b16 %v336, %v335
    %v424 = vpack.c.b16 %v338, %v337
    %v425 = vpack.c.b16 %v340, %v339
    %v426 = vpack.c.b16 %v342, %v341
    %v427 = vpack.c.b16 %v344, %v343
    %v428 = vpack.c.b16 %v346, %v345
    %v429 = vpack.c.b16 %v348, %v347
    %v430 = vpack.c.b16 %v350, %v349
    %v431 = vpack.c.b16 %v352, %v351
    %v432 = vpack.c.b16 %v354, %v353
    %v433 = vpack.c.b16 %v356, %v355
    %v434 = vpack.c.b16 %v358, %v357
    %v435 = vpack.c.b16 %v360, %v359
    %v436 = vpack.c.b16 %v362, %v361
    %v437 = vpack.c.b16 %v364, %v363
    %v438 = vpack.c.b16 %v366, %v365
    %v439 = vpack.c.b16 %v368, %v367
    %v440 = vpack.c.b16 %v370, %v369
    %v441 = vpack.c.b16 %v372, %v371
    %v442 = vpack.c.b16 %v374, %v373
    %v443 = vpack.c.b16 %v376, %v375
    %v444 = vpack.c.b16 %v378, %v377
    %v445 = vpack.c.b16 %v380, %v379
    %v446 = vpack.c.b16 %v382, %v381
    %v447 = vpack.c.b16 %v384, %v383
    %v448 = vpack.c.b16 %v386, %v385
    %v449 = vpack.c.b16 %v388, %v387
    %v450 = vpack.c.b16 %v390, %v389
    %v451 = vpack.c.b16 %v392, %v391
    %v452 = vpack.c.b16 %v394, %v393
    %v453 = vpack.c.b16 %v396, %v395
    %v454 = vpack.c.b16 %v398, %v397
    %v455 = vpack.c.b16 %v400, %v399
    %v456 = vpack.c.b16 %v402, %v401
    %v457 = vpack.c.b16 %v404, %v403
    %v458 = vpack.c.b16 %v406, %v405
    %v459 = vpack.c.b16 %v408, %v407
    %v460 = vpack.c.b16 %v410, %v409
    %v461 = vpack.c.b16 %v412, %v411
    %v462 = vpack.c.b16 %v414, %v413
    %511 = vmatprep.subr.bf16.mxu0 0
    %512 = vmatpush1.bf16.msra.mxu0 %v415
    %513 = vmatprep.subr.bf16.mxu0 0
    %514 = vmatpush1.bf16.msra.mxu0 %v416
    %515 = vmatprep.subr.bf16.mxu0 0
    %516 = vmatpush1.bf16.msra.mxu0 %v417
    %517 = vmatprep.subr.bf16.mxu0 0
    %518 = vmatpush1.bf16.msra.mxu0 %v418
    %519 = vmatprep.subr.bf16.mxu0 0
    %520 = vmatpush1.bf16.msra.mxu0 %v419
    %521 = vmatprep.subr.bf16.mxu0 0
    %522 = vmatpush1.bf16.msra.mxu0 %v420
    %523 = vmatprep.subr.bf16.mxu0 0
    %524 = vmatpush1.bf16.msra.mxu0 %v421
    %525 = vmatprep.subr.bf16.mxu0 0
    %526 = vmatpush1.bf16.msra.mxu0 %v422
    %527 = vmatprep.subr.bf16.mxu0 0
    %528 = vmatpush1.bf16.msra.mxu0 %v423
    %529 = vmatprep.subr.bf16.mxu0 0
    %530 = vmatpush1.bf16.msra.mxu0 %v424
    %531 = vmatprep.subr.bf16.mxu0 0
    %532 = vmatpush1.bf16.msra.mxu0 %v425
    %533 = vmatprep.subr.bf16.mxu0 0
    %534 = vmatpush1.bf16.msra.mxu0 %v426
    %535 = vmatprep.subr.bf16.mxu0 0
    %536 = vmatpush1.bf16.msra.mxu0 %v427
    %537 = vmatprep.subr.bf16.mxu0 0
    %538 = vmatpush1.bf16.msra.mxu0 %v428
    %539 = vmatprep.subr.bf16.mxu0 0
    %540 = vmatpush1.bf16.msra.mxu0 %v429
    %541 = vmatprep.subr.bf16.mxu0 0
    %542 = vmatpush1.bf16.msra.mxu0 %v430
    %543 = vmatprep.mubr.bf16.mxu0 %v207
    %544 = vmatmul.mubr.bf16.gmra.mrb[0].mxu0 %v193
    %v545 = vpop.f32.mrb[0].mxu0
    %v546 = vadd.f32 0.0, %v545
    %v547 = vpop.f32.mrb[0].mxu0
    %v548 = vpop.f32.mrb[0].mxu0
    %v549 = vpop.f32.mrb[0].mxu0
    %550 = vdwg.mxu0
    %551 = vmatprep.subr.bf16.mxu0 0
    %552 = vmatpush1.bf16.msra.mxu0 %v431
    %553 = vmatprep.subr.bf16.mxu0 0
    %554 = vmatpush1.bf16.msra.mxu0 %v432
    %555 = vmatprep.subr.bf16.mxu0 0
    %556 = vmatpush1.bf16.msra.mxu0 %v433
    %557 = vmatprep.subr.bf16.mxu0 0
    %558 = vmatpush1.bf16.msra.mxu0 %v434
    %559 = vmatprep.subr.bf16.mxu0 0
    %560 = vmatpush1.bf16.msra.mxu0 %v435
    %561 = vmatprep.subr.bf16.mxu0 0
    %562 = vmatpush1.bf16.msra.mxu0 %v436
    %563 = vmatprep.subr.bf16.mxu0 0
    %564 = vmatpush1.bf16.msra.mxu0 %v437
    %565 = vmatprep.subr.bf16.mxu0 0
    %566 = vmatpush1.bf16.msra.mxu0 %v438
    %567 = vmatprep.subr.bf16.mxu0 0
    %568 = vmatpush1.bf16.msra.mxu0 %v439
    %569 = vmatprep.subr.bf16.mxu0 0
    %570 = vmatpush1.bf16.msra.mxu0 %v440
    %571 = vmatprep.subr.bf16.mxu0 0
    %572 = vmatpush1.bf16.msra.mxu0 %v441
    %573 = vmatprep.subr.bf16.mxu0 0
    %574 = vmatpush1.bf16.msra.mxu0 %v442
    %575 = vmatprep.subr.bf16.mxu0 0
    %576 = vmatpush1.bf16.msra.mxu0 %v443
    %577 = vmatprep.subr.bf16.mxu0 0
    %578 = vmatpush1.bf16.msra.mxu0 %v444
    %579 = vmatprep.subr.bf16.mxu0 0
    %580 = vmatpush1.bf16.msra.mxu0 %v445
    %581 = vmatprep.subr.bf16.mxu0 0
    %582 = vmatpush1.bf16.msra.mxu0 %v446
    %583 = vmatprep.mubr.bf16.mxu0 %v216
    %584 = vmatmul.mubr.bf16.gmra.mrb[0].mxu0 %v215
    %v585 = vpop.f32.mrb[0].mxu0
    %v586 = vadd.f32 %v546, %v585
    %v587 = vpop.f32.mrb[0].mxu0
    %v588 = vpop.f32.mrb[0].mxu0
    %v589 = vpop.f32.mrb[0].mxu0
    %590 = vdwg.mxu0
    %591 = vmatprep.subr.bf16.mxu0 0
    %592 = vmatpush1.bf16.msra.mxu0 %v447
    %593 = vmatprep.subr.bf16.mxu0 0
    %594 = vmatpush1.bf16.msra.mxu0 %v448
    %595 = vmatprep.subr.bf16.mxu0 0
    %596 = vmatpush1.bf16.msra.mxu0 %v449
    %597 = vmatprep.subr.bf16.mxu0 0
    %598 = vmatpush1.bf16.msra.mxu0 %v450
    %599 = vmatprep.subr.bf16.mxu0 0
    %600 = vmatpush1.bf16.msra.mxu0 %v451
    %601 = vmatprep.subr.bf16.mxu0 0
    %602 = vmatpush1.bf16.msra.mxu0 %v452
    %603 = vmatprep.subr.bf16.mxu0 0
    %604 = vmatpush1.bf16.msra.mxu0 %v453
    %605 = vmatprep.subr.bf16.mxu0 0
    %606 = vmatpush1.bf16.msra.mxu0 %v454
    %607 = vmatprep.subr.bf16.mxu0 0
    %608 = vmatpush1.bf16.msra.mxu0 %v455
    %609 = vmatprep.subr.bf16.mxu0 0
    %610 = vmatpush1.bf16.msra.mxu0 %v456
    %611 = vmatprep.subr.bf16.mxu0 0
    %612 = vmatpush1.bf16.msra.mxu0 %v457
    %613 = vmatprep.subr.bf16.mxu0 0
    %614 = vmatpush1.bf16.msra.mxu0 %v458
    %615 = vmatprep.subr.bf16.mxu0 0
    %616 = vmatpush1.bf16.msra.mxu0 %v459
    %617 = vmatprep.subr.bf16.mxu0 0
    %618 = vmatpush1.bf16.msra.mxu0 %v460
    %619 = vmatprep.subr.bf16.mxu0 0
    %620 = vmatpush1.bf16.msra.mxu0 %v461
    %621 = vmatprep.subr.bf16.mxu0 0
    %622 = vmatpush1.bf16.msra.mxu0 %v462
    %623 = vmatprep.mubr.bf16.mxu0 %v214
    %624 = vmatmul.mubr.bf16.gmra.mrb[0].mxu0 %v200
    %v625 = vpop.f32.mrb[0].mxu0
    %v626 = vadd.f32 %v586, %v625
    %v627 = vpop.f32.mrb[0].mxu0
    %v628 = vpop.f32.mrb[0].mxu0
    %v629 = vpop.f32.mrb[0].mxu0
    %630 = vdwg.mxu0
    %v631 = vmax.f32 %v626, 0.0
    %v632 = vpack.c.bf16 %v631, %v631
    %v633 = vld [vmem:[#allocation7] sm:$0xf]
    %v634 = vld [vmem:[#allocation7 + $0x4] sm:$0xf]
    %v635 = vld [vmem:[#allocation7 + $0x8] sm:$0xf]
    %v636 = vld [vmem:[#allocation7 + $0xc] sm:$0xf]
    %v637 = vld [vmem:[#allocation7 + $0x10] sm:$0xf]
    %v638 = vld [vmem:[#allocation7 + $0x14] sm:$0xf]
    %v639 = vld [vmem:[#allocation7 + $0x18] sm:$0xf]
    %v640 = vld [vmem:[#allocation7 + $0x1c] sm:$0xf]
    %v641 = vld [vmem:[#allocation7 + $0x20] sm:$0xf]
    %v642 = vld [vmem:[#allocation7 + $0x24] sm:$0xf]
    %v643 = vld [vmem:[#allocation7 + $0x28] sm:$0xf]
    %v644 = vld [vmem:[#allocation7 + $0x2c] sm:$0xf]
    %v645 = vld [vmem:[#allocation7 + $0x30] sm:$0xf]
    %v646 = vld [vmem:[#allocation7 + $0x34] sm:$0xf]
    %v647 = vld [vmem:[#allocation7 + $0x38] sm:$0xf]
    %v648 = vld [vmem:[#allocation7 + $0x3c] sm:$0xf]
    %v665 = vunpack.c.l.b16 %v633
    %v666 = vunpack.c.l.b16 %v634
    %v667 = vunpack.c.l.b16 %v635
    %v668 = vunpack.c.l.b16 %v636
    %v669 = vunpack.c.l.b16 %v637
    %v670 = vunpack.c.l.b16 %v638
    %v671 = vunpack.c.l.b16 %v639
    %v672 = vunpack.c.l.b16 %v640
    %v673 = vunpack.c.l.b16 %v641
    %v674 = vunpack.c.l.b16 %v642
    %v675 = vunpack.c.l.b16 %v643
    %v676 = vunpack.c.l.b16 %v644
    %v677 = vunpack.c.l.b16 %v645
    %v678 = vunpack.c.l.b16 %v646
    %v679 = vunpack.c.l.b16 %v647
    %v680 = vunpack.c.l.b16 %v648
    %v681 = vpack.c.b16 %v666, %v665
    %v682 = vpack.c.b16 %v668, %v667
    %v683 = vpack.c.b16 %v670, %v669
    %v684 = vpack.c.b16 %v672, %v671
    %v685 = vpack.c.b16 %v674, %v673
    %v686 = vpack.c.b16 %v676, %v675
    %v687 = vpack.c.b16 %v678, %v677
    %v688 = vpack.c.b16 %v680, %v679
    %697 = vmatprep.subr.bf16.mxu0 0
    %698 = vmatpush1.bf16.msra.mxu0 %v681
    %699 = vmatprep.subr.bf16.mxu0 0
    %700 = vmatpush1.bf16.msra.mxu0 %v682
    %701 = vmatprep.subr.bf16.mxu0 0
    %702 = vmatpush1.bf16.msra.mxu0 %v683
    %703 = vmatprep.subr.bf16.mxu0 0
    %704 = vmatpush1.bf16.msra.mxu0 %v684
    %705 = vmatprep.subr.bf16.mxu0 0
    %706 = vmatpush1.bf16.msra.mxu0 %v685
    %707 = vmatprep.subr.bf16.mxu0 0
    %708 = vmatpush1.bf16.msra.mxu0 %v686
    %709 = vmatprep.subr.bf16.mxu0 0
    %710 = vmatpush1.bf16.msra.mxu0 %v687
    %711 = vmatprep.subr.bf16.mxu0 0
    %712 = vmatpush1.bf16.msra.mxu0 %v688
    %713 = vmatprep.subr.bf16.mxu0 0
    %714 = vmatpush1.bf16.msra.mxu0 0
    %715 = vmatprep.subr.bf16.mxu0 0
    %716 = vmatpush1.bf16.msra.mxu0 0
    %717 = vmatprep.subr.bf16.mxu0 0
    %718 = vmatpush1.bf16.msra.mxu0 0
    %719 = vmatprep.subr.bf16.mxu0 0
    %720 = vmatpush1.bf16.msra.mxu0 0
    %721 = vmatprep.subr.bf16.mxu0 0
    %722 = vmatpush1.bf16.msra.mxu0 0
    %723 = vmatprep.subr.bf16.mxu0 0
    %724 = vmatpush1.bf16.msra.mxu0 0
    %725 = vmatprep.subr.bf16.mxu0 0
    %726 = vmatpush1.bf16.msra.mxu0 0
    %727 = vmatprep.subr.bf16.mxu0 0
    %728 = vmatpush1.bf16.msra.mxu0 0
    %729 = vmatprep.mubr.bf16.mxu0 0
    %730 = vmatmul.mubr.bf16.gmra.mrb[0].mxu0 %v632
    %v731 = vpop.f32.mrb[0].mxu0
    %v732 = vadd.f32 0.0, %v731
    %v733 = vpop.f32.mrb[0].mxu0
    %v734 = vpop.f32.mrb[0].mxu0
    %v735 = vpop.f32.mrb[0].mxu0
    %736 = vdwg.mxu0
    %v737 = vmax.f32 %v732, 0.0
    %v738 = vpack.c.bf16 %v737, %v737
    %v739 = vld [vmem:[#allocation8] sm:$0xf]
    %v740 = vld [vmem:[#allocation8 + $0x4] sm:$0xf]
    %v741 = vld [vmem:[#allocation8 + $0x8] sm:$0xf]
    %v742 = vld [vmem:[#allocation8 + $0xc] sm:$0xf]
    %v743 = vld [vmem:[#allocation8 + $0x10] sm:$0xf]
    %v744 = vld [vmem:[#allocation8 + $0x14] sm:$0xf]
    %v745 = vld [vmem:[#allocation8 + $0x18] sm:$0xf]
    %v746 = vld [vmem:[#allocation8 + $0x1c] sm:$0xf]
    %v747 = vld [vmem:[#allocation8 + $0x20] sm:$0xf]
    %v748 = vld [vmem:[#allocation8 + $0x24] sm:$0xf]
    %v749 = vld [vmem:[#allocation8 + $0x28] sm:$0xf]
    %v750 = vld [vmem:[#allocation8 + $0x2c] sm:$0xf]
    %v751 = vld [vmem:[#allocation8 + $0x30] sm:$0xf]
    %v752 = vld [vmem:[#allocation8 + $0x34] sm:$0xf]
    %v753 = vld [vmem:[#allocation8 + $0x38] sm:$0xf]
    %v754 = vld [vmem:[#allocation8 + $0x3c] sm:$0xf]
    %v771 = vunpack.c.l.b16 %v739
    %v772 = vunpack.c.l.b16 %v740
    %v773 = vunpack.c.l.b16 %v741
    %v774 = vunpack.c.l.b16 %v742
    %v775 = vunpack.c.l.b16 %v743
    %v776 = vunpack.c.l.b16 %v744
    %v777 = vunpack.c.l.b16 %v745
    %v778 = vunpack.c.l.b16 %v746
    %v779 = vunpack.c.l.b16 %v747
    %v780 = vunpack.c.l.b16 %v748
    %v781 = vunpack.c.l.b16 %v749
    %v782 = vunpack.c.l.b16 %v750
    %v783 = vunpack.c.l.b16 %v751
    %v784 = vunpack.c.l.b16 %v752
    %v785 = vunpack.c.l.b16 %v753
    %v786 = vunpack.c.l.b16 %v754
    %v787 = vpack.c.b16 %v772, %v771
    %v788 = vpack.c.b16 %v774, %v773
    %v789 = vpack.c.b16 %v776, %v775
    %v790 = vpack.c.b16 %v778, %v777
    %v791 = vpack.c.b16 %v780, %v779
    %v792 = vpack.c.b16 %v782, %v781
    %v793 = vpack.c.b16 %v784, %v783
    %v794 = vpack.c.b16 %v786, %v785
    %803 = vmatprep.subr.bf16.mxu0 0
    %804 = vmatpush1.bf16.msra.mxu0 %v787
    %805 = vmatprep.subr.bf16.mxu0 0
    %806 = vmatpush1.bf16.msra.mxu0 %v788
    %807 = vmatprep.subr.bf16.mxu0 0
    %808 = vmatpush1.bf16.msra.mxu0 %v789
    %809 = vmatprep.subr.bf16.mxu0 0
    %810 = vmatpush1.bf16.msra.mxu0 %v790
    %811 = vmatprep.subr.bf16.mxu0 0
    %812 = vmatpush1.bf16.msra.mxu0 %v791
    %813 = vmatprep.subr.bf16.mxu0 0
    %814 = vmatpush1.bf16.msra.mxu0 %v792
    %815 = vmatprep.subr.bf16.mxu0 0
    %816 = vmatpush1.bf16.msra.mxu0 %v793
    %817 = vmatprep.subr.bf16.mxu0 0
    %818 = vmatpush1.bf16.msra.mxu0 %v794
    %819 = vmatprep.subr.bf16.mxu0 0
    %820 = vmatpush1.bf16.msra.mxu0 0
    %821 = vmatprep.subr.bf16.mxu0 0
    %822 = vmatpush1.bf16.msra.mxu0 0
    %823 = vmatprep.subr.bf16.mxu0 0
    %824 = vmatpush1.bf16.msra.mxu0 0
    %825 = vmatprep.subr.bf16.mxu0 0
    %826 = vmatpush1.bf16.msra.mxu0 0
    %827 = vmatprep.subr.bf16.mxu0 0
    %828 = vmatpush1.bf16.msra.mxu0 0
    %829 = vmatprep.subr.bf16.mxu0 0
    %830 = vmatpush1.bf16.msra.mxu0 0
    %831 = vmatprep.subr.bf16.mxu0 0
    %832 = vmatpush1.bf16.msra.mxu0 0
    %833 = vmatprep.subr.bf16.mxu0 0
    %834 = vmatpush1.bf16.msra.mxu0 0
    %835 = vmatprep.mubr.bf16.mxu0 0
    %836 = vmatmul.mubr.bf16.gmra.mrb[0].mxu0 %v738
    %v837 = vpop.f32.mrb[0].mxu0
    %v838 = vadd.f32 0.0, %v837
    %v839 = vpop.f32.mrb[0].mxu0
    %v840 = vpop.f32.mrb[0].mxu0
    %v841 = vpop.f32.mrb[0].mxu0
    %842 = vdwg.mxu0
    %843 = vst [vmem:[#allocation10] sm:$0x3] %v838
    // Predicated region
    $region34: #{tpu_custom_call.1} parent=1 // pred_check
      _
    $region35: #{tpu_custom_call.1} parent=1 // pred_check_branch
      %845 = sbr.rel (0) target = $region37
    $region36: #{tpu_custom_call.1} parent=1 // pred_region
      %s847 = ssub.s32 32, 32
      %848 = vsyncadd [#allocation4], %s847
      %s850 = sshll.u32 [#allocation10], 4
      %s851 = int_to_ptr.vmem [resolvable:$true] %s850
      %853 = dma.vmem_to_hbm [thread:$0]  %s851, 32, %s4, [#allocation4]
    $region37: #{tpu_custom_call.1} parent=1 // pred_fallthru
      _
    // Predicated region
    $region38: #{tpu_custom_call.1} parent=1 // pred_check
      _
    $region39: #{tpu_custom_call.1} parent=1 // pred_check_branch
      %855 = sbr.rel (0) target = $region41
    $region40: #{tpu_custom_call.1} parent=1 // pred_region
      %856 = dma.done [#allocation4], 32
    $region41: #{tpu_custom_call.1} parent=1 // pred_fallthru
      _
    %857 = vsyncpa [#allocation3], 1
    %858 = vsyncpa [#allocation6], 1
    %859 = vsyncpa [#allocation9], 1
    %860 = vsyncpa [#allocation4], 1

// kernel: tpu_custom_call.1
$region0: #{tpu_custom_call.1}
  #allocation0 [shape = 'u32[]', space=smem, size = 0x4, offset = 0x4, fixed_abs, tag = 'smem constant byte address 0x4 - core index']
  #allocation1 [shape = 'u32[144,128]{1,0:T(1,128)}', space=vmem, size = 0x12000, scoped, tag = 'internal scratch']
  %s0 = inlined_call_operand.hbm [shape: bf16[2,768], index: 0, kind: input, shape index: {}]
  %s1 = inlined_call_operand.hbm [shape: bf16[768,128], index: 1, kind: input, shape index: {}]
  %s2 = inlined_call_operand.hbm [shape: bf16[128,128], index: 2, kind: input, shape index: {}]
  %s3 = inlined_call_operand.hbm [shape: bf16[128,128], index: 3, kind: input, shape index: {}]
  %s4 = inlined_call_operand.hbm [shape: f32[2,128], index: 4, kind: output, shape index: {}]
  %s5 = sld [smem:[#allocation0]]
  $region42: #{tpu_custom_call.1} parent=0
    _
  %s7 = ssub.s32 1, %s5
  %s8 = scalar_select 0, %s7, %s5
  $region1: #{tpu_custom_call.1} parent=0
    #allocation2 [shape = 'u8[3072]{0}', space=vmem, size = 0xc00, scoped, tag = 'input window, operand 0, single buffered']
    #allocation3 [shape = 's32[1]{0}', space=sflag, size = 0x4, scoped, tag = 'scoped memory for tpu_custom_call.1']
    #allocation4 [shape = 's32[1]{0}', space=sflag, size = 0x4, scoped, tag = 'scoped memory for tpu_custom_call.1']
    #allocation5 [shape = 'u8[196608]{0}', space=vmem, size = 0x30000, scoped, tag = 'input window, operand 1, single buffered']
    #allocation6 [shape = 's32[1]{0}', space=sflag, size = 0x4, scoped, tag = 'scoped memory for tpu_custom_call.1']
    #allocation7 [shape = 'u8[32768]{0}', space=vmem, size = 0x8000, scoped, tag = 'input window, operand 2, single buffered']
    #allocation8 [shape = 'u8[32768]{0}', space=vmem, size = 0x8000, scoped, tag = 'input window, operand 3, single buffered']
    #allocation9 [shape = 's32[1]{0}', space=sflag, size = 0x4, scoped, tag = 'scoped memory for tpu_custom_call.1']
    #allocation10 [shape = 'u8[1024]{0}', space=vmem, size = 0x400, scoped, tag = 'output window, operand 0, single buffered']
    %9 = vsyncpa [#allocation3], 0
    %10 = vsyncpa [#allocation6], 0
    %11 = vsyncpa [#allocation9], 0
    %12 = vsyncpa [#allocation4], 0
    // Predicated region
    $region2: #{tpu_custom_call.1} parent=1 // pred_check
      _
    $region3: #{tpu_custom_call.1} parent=1 // pred_check_branch
      %14 = sbr.rel (0) target = $region5
    $region4: #{tpu_custom_call.1} parent=1 // pred_region
      %s16 = ssub.s32 96, 96
      %17 = vsyncadd [#allocation3], %s16
      %s19 = sshll.u32 [#allocation2], 4
      %s20 = int_to_ptr.vmem [resolvable:$true] %s19
      %22 = dma.hbm_to_vmem [thread:$0]  %s0, 96, %s20, [#allocation3]
    $region5: #{tpu_custom_call.1} parent=1 // pred_fallthru
      _
    // Predicated region
    $region6: #{tpu_custom_call.1} parent=1 // pred_check
      _
    $region7: #{tpu_custom_call.1} parent=1 // pred_check_branch
      %24 = sbr.rel (0) target = $region9
    $region8: #{tpu_custom_call.1} parent=1 // pred_region
      %s26 = ssub.s32 6144, 6144
      %27 = vsyncadd [#allocation6], %s26
      %s28 = sshll.u32 [#allocation5], 4
      %s29 = int_to_ptr.vmem [resolvable:$true] %s28
      %34 = dma.hbm_to_vmem [thread:$0]  %s1, 6144, %s29, [#allocation6], 64, 64, 4
    $region9: #{tpu_custom_call.1} parent=1 // pred_fallthru
      _
    // Predicated region
    $region10: #{tpu_custom_call.1} parent=1 // pred_check
      _
    $region11: #{tpu_custom_call.1} parent=1 // pred_check_branch
      %36 = sbr.rel (0) target = $region13
    $region12: #{tpu_custom_call.1} parent=1 // pred_region
      %s38 = ssub.s32 1024, 1024
      %39 = vsyncadd [#allocation6], %s38
      %s40 = sshll.u32 [#allocation7], 4
      %s41 = int_to_ptr.vmem [resolvable:$true] %s40
      %46 = dma.hbm_to_vmem [thread:$0]  %s2, 1024, %s41, [#allocation6], 64, 64, 4
    $region13: #{tpu_custom_call.1} parent=1 // pred_fallthru
      _
    // Predicated region
    $region14: #{tpu_custom_call.1} parent=1 // pred_check
      _
    $region15: #{tpu_custom_call.1} parent=1 // pred_check_branch
      %48 = sbr.rel (0) target = $region17
    $region16: #{tpu_custom_call.1} parent=1 // pred_region
      %s50 = ssub.s32 1024, 1024
      %51 = vsyncadd [#allocation9], %s50
      %s52 = sshll.u32 [#allocation8], 4
      %s53 = int_to_ptr.vmem [resolvable:$true] %s52
      %58 = dma.hbm_to_vmem [thread:$0]  %s3, 1024, %s53, [#allocation9], 64, 64, 4
    $region17: #{tpu_custom_call.1} parent=1 // pred_fallthru
      _
    // Predicated region
    $region18: #{tpu_custom_call.1} parent=1 // pred_check
      _
    $region19: #{tpu_custom_call.1} parent=1 // pred_check_branch
      %60 = sbr.rel (0) target = $region21
    $region20: #{tpu_custom_call.1} parent=1 // pred_region
      %61 = dma.done [#allocation3], 96
    $region21: #{tpu_custom_call.1} parent=1 // pred_fallthru
      _
    // Predicated region
    $region22: #{tpu_custom_call.1} parent=1 // pred_check
      _
    $region23: #{tpu_custom_call.1} parent=1 // pred_check_branch
      %63 = sbr.rel (0) target = $region25
    $region24: #{tpu_custom_call.1} parent=1 // pred_region
      %64 = dma.done [#allocation6], 6144
    $region25: #{tpu_custom_call.1} parent=1 // pred_fallthru
      _
    // Predicated region
    $region26: #{tpu_custom_call.1} parent=1 // pred_check
      _
    $region27: #{tpu_custom_call.1} parent=1 // pred_check_branch
      %66 = sbr.rel (0) target = $region29
    $region28: #{tpu_custom_call.1} parent=1 // pred_region
      %67 = dma.done [#allocation6], 1024
    $region29: #{tpu_custom_call.1} parent=1 // pred_fallthru
      _
    // Predicated region
    $region30: #{tpu_custom_call.1} parent=1 // pred_check
      _
    $region31: #{tpu_custom_call.1} parent=1 // pred_check_branch
      %69 = sbr.rel (0) target = $region33
    $region32: #{tpu_custom_call.1} parent=1 // pred_region
      %70 = dma.done [#allocation9], 1024
    $region33: #{tpu_custom_call.1} parent=1 // pred_fallthru
      _
    %v72 = vld [vmem:[#allocation2] sm:$0x3f]
    %v73 = vld [vmem:[#allocation5] sm:$0xf]
    %v74 = vld [vmem:[#allocation5 + $0x4] sm:$0xf]
    %v75 = vld [vmem:[#allocation5 + $0x8] sm:$0xf]
    %v76 = vld [vmem:[#allocation5 + $0xc] sm:$0xf]
    %v77 = vld [vmem:[#allocation5 + $0x10] sm:$0xf]
    %v78 = vld [vmem:[#allocation5 + $0x14] sm:$0xf]
    %v79 = vld [vmem:[#allocation5 + $0x18] sm:$0xf]
    %v80 = vld [vmem:[#allocation5 + $0x1c] sm:$0xf]
    %v81 = vld [vmem:[#allocation5 + $0x20] sm:$0xf]
    %v82 = vld [vmem:[#allocation5 + $0x24] sm:$0xf]
    %v83 = vld [vmem:[#allocation5 + $0x28] sm:$0xf]
    %v84 = vld [vmem:[#allocation5 + $0x2c] sm:$0xf]
    %v85 = vld [vmem:[#allocation5 + $0x30] sm:$0xf]
    %v86 = vld [vmem:[#allocation5 + $0x34] sm:$0xf]
    %v87 = vld [vmem:[#allocation5 + $0x38] sm:$0xf]
    %v88 = vld [vmem:[#allocation5 + $0x3c] sm:$0xf]
    %v89 = vld [vmem:[#allocation5 + $0x40] sm:$0xf]
    %v90 = vld [vmem:[#allocation5 + $0x44] sm:$0xf]
    %v91 = vld [vmem:[#allocation5 + $0x48] sm:$0xf]
    %v92 = vld [vmem:[#allocation5 + $0x4c] sm:$0xf]
    %v93 = vld [vmem:[#allocation5 + $0x50] sm:$0xf]
    %v94 = vld [vmem:[#allocation5 + $0x54] sm:$0xf]
    %v95 = vld [vmem:[#allocation5 + $0x58] sm:$0xf]
    %v96 = vld [vmem:[#allocation5 + $0x5c] sm:$0xf]
    %v97 = vld [vmem:[#allocation5 + $0x60] sm:$0xf]
    %v98 = vld [vmem:[#allocation5 + $0x64] sm:$0xf]
    %v99 = vld [vmem:[#allocation5 + $0x68] sm:$0xf]
    %v100 = vld [vmem:[#allocation5 + $0x6c] sm:$0xf]
    %v101 = vld [vmem:[#allocation5 + $0x70] sm:$0xf]
    %v102 = vld [vmem:[#allocation5 + $0x74] sm:$0xf]
    %v103 = vld [vmem:[#allocation5 + $0x78] sm:$0xf]
    %v104 = vld [vmem:[#allocation5 + $0x7c] sm:$0xf]
    %v105 = vld [vmem:[#allocation5 + $0x80] sm:$0xf]
    %v106 = vld [vmem:[#allocation5 + $0x84] sm:$0xf]
    %v107 = vld [vmem:[#allocation5 + $0x88] sm:$0xf]
    %v108 = vld [vmem:[#allocation5 + $0x8c] sm:$0xf]
    %v109 = vld [vmem:[#allocation5 + $0x90] sm:$0xf]
    %v110 = vld [vmem:[#allocation5 + $0x94] sm:$0xf]
    %v111 = vld [vmem:[#allocation5 + $0x98] sm:$0xf]
    %v112 = vld [vmem:[#allocation5 + $0x9c] sm:$0xf]
    %v113 = vld [vmem:[#allocation5 + $0xa0] sm:$0xf]
    %v114 = vld [vmem:[#allocation5 + $0xa4] sm:$0xf]
    %v115 = vld [vmem:[#allocation5 + $0xa8] sm:$0xf]
    %v116 = vld [vmem:[#allocation5 + $0xac] sm:$0xf]
    %v117 = vld [vmem:[#allocation5 + $0xb0] sm:$0xf]
    %v118 = vld [vmem:[#allocation5 + $0xb4] sm:$0xf]
    %v119 = vld [vmem:[#allocation5 + $0xb8] sm:$0xf]
    %v120 = vld [vmem:[#allocation5 + $0xbc] sm:$0xf]
    %v121 = vld [vmem:[#allocation5 + $0xc0] sm:$0xf]
    %v122 = vld [vmem:[#allocation5 + $0xc4] sm:$0xf]
    %v123 = vld [vmem:[#allocation5 + $0xc8] sm:$0xf]
    %v124 = vld [vmem:[#allocation5 + $0xcc] sm:$0xf]
    %v125 = vld [vmem:[#allocation5 + $0xd0] sm:$0xf]
    %v126 = vld [vmem:[#allocation5 + $0xd4] sm:$0xf]
    %v127 = vld [vmem:[#allocation5 + $0xd8] sm:$0xf]
    %v128 = vld [vmem:[#allocation5 + $0xdc] sm:$0xf]
    %v129 = vld [vmem:[#allocation5 + $0xe0] sm:$0xf]
    %v130 = vld [vmem:[#allocation5 + $0xe4] sm:$0xf]
    %v131 = vld [vmem:[#allocation5 + $0xe8] sm:$0xf]
    %v132 = vld [vmem:[#allocation5 + $0xec] sm:$0xf]
    %v133 = vld [vmem:[#allocation5 + $0xf0] sm:$0xf]
    %v134 = vld [vmem:[#allocation5 + $0xf4] sm:$0xf]
    %v135 = vld [vmem:[#allocation5 + $0xf8] sm:$0xf]
    %v136 = vld [vmem:[#allocation5 + $0xfc] sm:$0xf]
    %v137 = vld [vmem:[#allocation5 + $0x100] sm:$0xf]
    %v138 = vld [vmem:[#allocation5 + $0x104] sm:$0xf]
    %v139 = vld [vmem:[#allocation5 + $0x108] sm:$0xf]
    %v140 = vld [vmem:[#allocation5 + $0x10c] sm:$0xf]
    %v141 = vld [vmem:[#allocation5 + $0x110] sm:$0xf]
    %v142 = vld [vmem:[#allocation5 + $0x114] sm:$0xf]
    %v143 = vld [vmem:[#allocation5 + $0x118] sm:$0xf]
    %v144 = vld [vmem:[#allocation5 + $0x11c] sm:$0xf]
    %v145 = vld [vmem:[#allocation5 + $0x120] sm:$0xf]
    %v146 = vld [vmem:[#allocation5 + $0x124] sm:$0xf]
    %v147 = vld [vmem:[#allocation5 + $0x128] sm:$0xf]
    %v148 = vld [vmem:[#allocation5 + $0x12c] sm:$0xf]
    %v149 = vld [vmem:[#allocation5 + $0x130] sm:$0xf]
    %v150 = vld [vmem:[#allocation5 + $0x134] sm:$0xf]
    %v151 = vld [vmem:[#allocation5 + $0x138] sm:$0xf]
    %v152 = vld [vmem:[#allocation5 + $0x13c] sm:$0xf]
    %v153 = vld [vmem:[#allocation5 + $0x140] sm:$0xf]
    %v154 = vld [vmem:[#allocation5 + $0x144] sm:$0xf]
    %v155 = vld [vmem:[#allocation5 + $0x148] sm:$0xf]
    %v156 = vld [vmem:[#allocation5 + $0x14c] sm:$0xf]
    %v157 = vld [vmem:[#allocation5 + $0x150] sm:$0xf]
    %v158 = vld [vmem:[#allocation5 + $0x154] sm:$0xf]
    %v159 = vld [vmem:[#allocation5 + $0x158] sm:$0xf]
    %v160 = vld [vmem:[#allocation5 + $0x15c] sm:$0xf]
    %v161 = vld [vmem:[#allocation5 + $0x160] sm:$0xf]
    %v162 = vld [vmem:[#allocation5 + $0x164] sm:$0xf]
    %v163 = vld [vmem:[#allocation5 + $0x168] sm:$0xf]
    %v164 = vld [vmem:[#allocation5 + $0x16c] sm:$0xf]
    %v165 = vld [vmem:[#allocation5 + $0x170] sm:$0xf]
    %v166 = vld [vmem:[#allocation5 + $0x174] sm:$0xf]
    %v167 = vld [vmem:[#allocation5 + $0x178] sm:$0xf]
    %v168 = vld [vmem:[#allocation5 + $0x17c] sm:$0xf]
    %v170 = vcombine.high %v72, %v72
    %v172 = vunpack.c.l.s4 1966171168
    %v173 = vunpack.c.0.s8 %v172
    %v174 = vlaneseq
    %v175 = vshrl.u32 %v174, 7
    %v176 = vsub.s32 %v173, %v175
    %v177 = vrot.slane %v72, %v176
    %v179 = vunpack.c.l.s4 1966171168
    %v180 = vunpack.c.0.s8 %v179
    %v181 = vlaneseq
    %v182 = vshrl.u32 %v181, 7
    %v183 = vsub.s32 %v180, %v182
    %v184 = vrot.slane %v170, %v183
    %v185 = vcombine.high %v177, %v177
    %v186 = vcombine.high %v184, %v184
    %v188 = vunpack.c.l.s4 1966171168
    %v189 = vunpack.c.0.s8 %v188
    %v190 = vlaneseq
    %v191 = vshrl.u32 %v190, 7
    %v192 = vsub.s32 %v189, %v191
    %v193 = vrot.slane %v177, %v192
    %v195 = vunpack.c.l.s4 1966171168
    %v196 = vunpack.c.0.s8 %v195
    %v197 = vlaneseq
    %v198 = vshrl.u32 %v197, 7
    %v199 = vsub.s32 %v196, %v198
    %v200 = vrot.slane %v184, %v199
    %v202 = vunpack.c.l.s4 1966171168
    %v203 = vunpack.c.0.s8 %v202
    %v204 = vlaneseq
    %v205 = vshrl.u32 %v204, 7
    %v206 = vsub.s32 %v203, %v205
    %v207 = vrot.slane %v185, %v206
    %v209 = vunpack.c.l.s4 1966171168
    %v210 = vunpack.c.0.s8 %v209
    %v211 = vlaneseq
    %v212 = vshrl.u32 %v211, 7
    %v213 = vsub.s32 %v210, %v212
    %v214 = vrot.slane %v186, %v213
    %v215 = vcombine.high %v193, %v193
    %v216 = vcombine.high %v207, %v207
    %v319 = vunpack.c.l.b16 %v73
    %v320 = vunpack.c.l.b16 %v74
    %v321 = vunpack.c.l.b16 %v75
    %v322 = vunpack.c.l.b16 %v76
    %v323 = vunpack.c.l.b16 %v77
    %v324 = vunpack.c.l.b16 %v78
    %v325 = vunpack.c.l.b16 %v79
    %v326 = vunpack.c.l.b16 %v80
    %v327 = vunpack.c.l.b16 %v81
    %v328 = vunpack.c.l.b16 %v82
    %v329 = vunpack.c.l.b16 %v83
    %v330 = vunpack.c.l.b16 %v84
    %v331 = vunpack.c.l.b16 %v85
    %v332 = vunpack.c.l.b16 %v86
    %v333 = vunpack.c.l.b16 %v87
    %v334 = vunpack.c.l.b16 %v88
    %v335 = vunpack.c.l.b16 %v89
    %v336 = vunpack.c.l.b16 %v90
    %v337 = vunpack.c.l.b16 %v91
    %v338 = vunpack.c.l.b16 %v92
    %v339 = vunpack.c.l.b16 %v93
    %v340 = vunpack.c.l.b16 %v94
    %v341 = vunpack.c.l.b16 %v95
    %v342 = vunpack.c.l.b16 %v96
    %v343 = vunpack.c.l.b16 %v97
    %v344 = vunpack.c.l.b16 %v98
    %v345 = vunpack.c.l.b16 %v99
    %v346 = vunpack.c.l.b16 %v100
    %v347 = vunpack.c.l.b16 %v101
    %v348 = vunpack.c.l.b16 %v102
    %v349 = vunpack.c.l.b16 %v103
    %v350 = vunpack.c.l.b16 %v104
    %v351 = vunpack.c.l.b16 %v105
    %v352 = vunpack.c.l.b16 %v106
    %v353 = vunpack.c.l.b16 %v107
    %v354 = vunpack.c.l.b16 %v108
    %v355 = vunpack.c.l.b16 %v109
    %v356 = vunpack.c.l.b16 %v110
    %v357 = vunpack.c.l.b16 %v111
    %v358 = vunpack.c.l.b16 %v112
    %v359 = vunpack.c.l.b16 %v113
    %v360 = vunpack.c.l.b16 %v114
    %v361 = vunpack.c.l.b16 %v115
    %v362 = vunpack.c.l.b16 %v116
    %v363 = vunpack.c.l.b16 %v117
    %v364 = vunpack.c.l.b16 %v118
    %v365 = vunpack.c.l.b16 %v119
    %v366 = vunpack.c.l.b16 %v120
    %v367 = vunpack.c.l.b16 %v121
    %v368 = vunpack.c.l.b16 %v122
    %v369 = vunpack.c.l.b16 %v123
    %v370 = vunpack.c.l.b16 %v124
    %v371 = vunpack.c.l.b16 %v125
    %v372 = vunpack.c.l.b16 %v126
    %v373 = vunpack.c.l.b16 %v127
    %v374 = vunpack.c.l.b16 %v128
    %v375 = vunpack.c.l.b16 %v129
    %v376 = vunpack.c.l.b16 %v130
    %v377 = vunpack.c.l.b16 %v131
    %v378 = vunpack.c.l.b16 %v132
    %v379 = vunpack.c.l.b16 %v133
    %v380 = vunpack.c.l.b16 %v134
    %v381 = vunpack.c.l.b16 %v135
    %v382 = vunpack.c.l.b16 %v136
    %v383 = vunpack.c.l.b16 %v137
    %v384 = vunpack.c.l.b16 %v138
    %v385 = vunpack.c.l.b16 %v139
    %v386 = vunpack.c.l.b16 %v140
    %v387 = vunpack.c.l.b16 %v141
    %v388 = vunpack.c.l.b16 %v142
    %v389 = vunpack.c.l.b16 %v143
    %v390 = vunpack.c.l.b16 %v144
    %v391 = vunpack.c.l.b16 %v145
    %v392 = vunpack.c.l.b16 %v146
    %v393 = vunpack.c.l.b16 %v147
    %v394 = vunpack.c.l.b16 %v148
    %v395 = vunpack.c.l.b16 %v149
    %v396 = vunpack.c.l.b16 %v150
    %v397 = vunpack.c.l.b16 %v151
    %v398 = vunpack.c.l.b16 %v152
    %v399 = vunpack.c.l.b16 %v153
    %v400 = vunpack.c.l.b16 %v154
    %v401 = vunpack.c.l.b16 %v155
    %v402 = vunpack.c.l.b16 %v156
    %v403 = vunpack.c.l.b16 %v157
    %v404 = vunpack.c.l.b16 %v158
    %v405 = vunpack.c.l.b16 %v159
    %v406 = vunpack.c.l.b16 %v160
    %v407 = vunpack.c.l.b16 %v161
    %v408 = vunpack.c.l.b16 %v162
    %v409 = vunpack.c.l.b16 %v163
    %v410 = vunpack.c.l.b16 %v164
    %v411 = vunpack.c.l.b16 %v165
    %v412 = vunpack.c.l.b16 %v166
    %v413 = vunpack.c.l.b16 %v167
    %v414 = vunpack.c.l.b16 %v168
    %v415 = vpack.c.b16 %v320, %v319
    %v416 = vpack.c.b16 %v322, %v321
    %v417 = vpack.c.b16 %v324, %v323
    %v418 = vpack.c.b16 %v326, %v325
    %v419 = vpack.c.b16 %v328, %v327
    %v420 = vpack.c.b16 %v330, %v329
    %v421 = vpack.c.b16 %v332, %v331
    %v422 = vpack.c.b16 %v334, %v333
    %v423 = vpack.c.b16 %v336, %v335
    %v424 = vpack.c.b16 %v338, %v337
    %v425 = vpack.c.b16 %v340, %v339
    %v426 = vpack.c.b16 %v342, %v341
    %v427 = vpack.c.b16 %v344, %v343
    %v428 = vpack.c.b16 %v346, %v345
    %v429 = vpack.c.b16 %v348, %v347
    %v430 = vpack.c.b16 %v350, %v349
    %v431 = vpack.c.b16 %v352, %v351
    %v432 = vpack.c.b16 %v354, %v353
    %v433 = vpack.c.b16 %v356, %v355
    %v434 = vpack.c.b16 %v358, %v357
    %v435 = vpack.c.b16 %v360, %v359
    %v436 = vpack.c.b16 %v362, %v361
    %v437 = vpack.c.b16 %v364, %v363
    %v438 = vpack.c.b16 %v366, %v365
    %v439 = vpack.c.b16 %v368, %v367
    %v440 = vpack.c.b16 %v370, %v369
    %v441 = vpack.c.b16 %v372, %v371
    %v442 = vpack.c.b16 %v374, %v373
    %v443 = vpack.c.b16 %v376, %v375
    %v444 = vpack.c.b16 %v378, %v377
    %v445 = vpack.c.b16 %v380, %v379
    %v446 = vpack.c.b16 %v382, %v381
    %v447 = vpack.c.b16 %v384, %v383
    %v448 = vpack.c.b16 %v386, %v385
    %v449 = vpack.c.b16 %v388, %v387
    %v450 = vpack.c.b16 %v390, %v389
    %v451 = vpack.c.b16 %v392, %v391
    %v452 = vpack.c.b16 %v394, %v393
    %v453 = vpack.c.b16 %v396, %v395
    %v454 = vpack.c.b16 %v398, %v397
    %v455 = vpack.c.b16 %v400, %v399
    %v456 = vpack.c.b16 %v402, %v401
    %v457 = vpack.c.b16 %v404, %v403
    %v458 = vpack.c.b16 %v406, %v405
    %v459 = vpack.c.b16 %v408, %v407
    %v460 = vpack.c.b16 %v410, %v409
    %v461 = vpack.c.b16 %v412, %v411
    %v462 = vpack.c.b16 %v414, %v413
    %511 = vmatprep.subr.bf16.mxu0 0
    %512 = vmatpush1.bf16.msra.mxu0 %v415
    %513 = vmatprep.subr.bf16.mxu0 0
    %514 = vmatpush1.bf16.msra.mxu0 %v416
    %515 = vmatprep.subr.bf16.mxu0 0
    %516 = vmatpush1.bf16.msra.mxu0 %v417
    %517 = vmatprep.subr.bf16.mxu0 0
    %518 = vmatpush1.bf16.msra.mxu0 %v418
    %519 = vmatprep.subr.bf16.mxu0 0
    %520 = vmatpush1.bf16.msra.mxu0 %v419
    %521 = vmatprep.subr.bf16.mxu0 0
    %522 = vmatpush1.bf16.msra.mxu0 %v420
    %523 = vmatprep.subr.bf16.mxu0 0
    %524 = vmatpush1.bf16.msra.mxu0 %v421
    %525 = vmatprep.subr.bf16.mxu0 0
    %526 = vmatpush1.bf16.msra.mxu0 %v422
    %527 = vmatprep.subr.bf16.mxu0 0
    %528 = vmatpush1.bf16.msra.mxu0 %v423
    %529 = vmatprep.subr.bf16.mxu0 0
    %530 = vmatpush1.bf16.msra.mxu0 %v424
    %531 = vmatprep.subr.bf16.mxu0 0
    %532 = vmatpush1.bf16.msra.mxu0 %v425
    %533 = vmatprep.subr.bf16.mxu0 0
    %534 = vmatpush1.bf16.msra.mxu0 %v426
    %535 = vmatprep.subr.bf16.mxu0 0
    %536 = vmatpush1.bf16.msra.mxu0 %v427
    %537 = vmatprep.subr.bf16.mxu0 0
    %538 = vmatpush1.bf16.msra.mxu0 %v428
    %539 = vmatprep.subr.bf16.mxu0 0
    %540 = vmatpush1.bf16.msra.mxu0 %v429
    %541 = vmatprep.subr.bf16.mxu0 0
    %542 = vmatpush1.bf16.msra.mxu0 %v430
    %543 = vmatprep.mubr.bf16.mxu0 %v207
    %544 = vmatmul.mubr.bf16.gmra.mrb[0].mxu0 %v193
    %v545 = vpop.f32.mrb[0].mxu0
    %v546 = vadd.f32 0.0, %v545
    %v547 = vpop.f32.mrb[0].mxu0
    %v548 = vpop.f32.mrb[0].mxu0
    %v549 = vpop.f32.mrb[0].mxu0
    %550 = vdwg.mxu0
    %551 = vmatprep.subr.bf16.mxu0 0
    %552 = vmatpush1.bf16.msra.mxu0 %v431
    %553 = vmatprep.subr.bf16.mxu0 0
    %554 = vmatpush1.bf16.msra.mxu0 %v432
    %555 = vmatprep.subr.bf16.mxu0 0
    %556 = vmatpush1.bf16.msra.mxu0 %v433
    %557 = vmatprep.subr.bf16.mxu0 0
    %558 = vmatpush1.bf16.msra.mxu0 %v434
    %559 = vmatprep.subr.bf16.mxu0 0
    %560 = vmatpush1.bf16.msra.mxu0 %v435
    %561 = vmatprep.subr.bf16.mxu0 0
    %562 = vmatpush1.bf16.msra.mxu0 %v436
    %563 = vmatprep.subr.bf16.mxu0 0
    %564 = vmatpush1.bf16.msra.mxu0 %v437
    %565 = vmatprep.subr.bf16.mxu0 0
    %566 = vmatpush1.bf16.msra.mxu0 %v438
    %567 = vmatprep.subr.bf16.mxu0 0
    %568 = vmatpush1.bf16.msra.mxu0 %v439
    %569 = vmatprep.subr.bf16.mxu0 0
    %570 = vmatpush1.bf16.msra.mxu0 %v440
    %571 = vmatprep.subr.bf16.mxu0 0
    %572 = vmatpush1.bf16.msra.mxu0 %v441
    %573 = vmatprep.subr.bf16.mxu0 0
    %574 = vmatpush1.bf16.msra.mxu0 %v442
    %575 = vmatprep.subr.bf16.mxu0 0
    %576 = vmatpush1.bf16.msra.mxu0 %v443
    %577 = vmatprep.subr.bf16.mxu0 0
    %578 = vmatpush1.bf16.msra.mxu0 %v444
    %579 = vmatprep.subr.bf16.mxu0 0
    %580 = vmatpush1.bf16.msra.mxu0 %v445
    %581 = vmatprep.subr.bf16.mxu0 0
    %582 = vmatpush1.bf16.msra.mxu0 %v446
    %583 = vmatprep.mubr.bf16.mxu0 %v216
    %584 = vmatmul.mubr.bf16.gmra.mrb[0].mxu0 %v215
    %v585 = vpop.f32.mrb[0].mxu0
    %v586 = vadd.f32 %v546, %v585
    %v587 = vpop.f32.mrb[0].mxu0
    %v588 = vpop.f32.mrb[0].mxu0
    %v589 = vpop.f32.mrb[0].mxu0
    %590 = vdwg.mxu0
    %591 = vmatprep.subr.bf16.mxu0 0
    %592 = vmatpush1.bf16.msra.mxu0 %v447
    %593 = vmatprep.subr.bf16.mxu0 0
    %594 = vmatpush1.bf16.msra.mxu0 %v448
    %595 = vmatprep.subr.bf16.mxu0 0
    %596 = vmatpush1.bf16.msra.mxu0 %v449
    %597 = vmatprep.subr.bf16.mxu0 0
    %598 = vmatpush1.bf16.msra.mxu0 %v450
    %599 = vmatprep.subr.bf16.mxu0 0
    %600 = vmatpush1.bf16.msra.mxu0 %v451
    %601 = vmatprep.subr.bf16.mxu0 0
    %602 = vmatpush1.bf16.msra.mxu0 %v452
    %603 = vmatprep.subr.bf16.mxu0 0
    %604 = vmatpush1.bf16.msra.mxu0 %v453
    %605 = vmatprep.subr.bf16.mxu0 0
    %606 = vmatpush1.bf16.msra.mxu0 %v454
    %607 = vmatprep.subr.bf16.mxu0 0
    %608 = vmatpush1.bf16.msra.mxu0 %v455
    %609 = vmatprep.subr.bf16.mxu0 0
    %610 = vmatpush1.bf16.msra.mxu0 %v456
    %611 = vmatprep.subr.bf16.mxu0 0
    %612 = vmatpush1.bf16.msra.mxu0 %v457
    %613 = vmatprep.subr.bf16.mxu0 0
    %614 = vmatpush1.bf16.msra.mxu0 %v458
    %615 = vmatprep.subr.bf16.mxu0 0
    %616 = vmatpush1.bf16.msra.mxu0 %v459
    %617 = vmatprep.subr.bf16.mxu0 0
    %618 = vmatpush1.bf16.msra.mxu0 %v460
    %619 = vmatprep.subr.bf16.mxu0 0
    %620 = vmatpush1.bf16.msra.mxu0 %v461
    %621 = vmatprep.subr.bf16.mxu0 0
    %622 = vmatpush1.bf16.msra.mxu0 %v462
    %623 = vmatprep.mubr.bf16.mxu0 %v214
    %624 = vmatmul.mubr.bf16.gmra.mrb[0].mxu0 %v200
    %v625 = vpop.f32.mrb[0].mxu0
    %v626 = vadd.f32 %v586, %v625
    %v627 = vpop.f32.mrb[0].mxu0
    %v628 = vpop.f32.mrb[0].mxu0
    %v629 = vpop.f32.mrb[0].mxu0
    %630 = vdwg.mxu0
    %v631 = vmax.f32 %v626, 0.0
    %v632 = vpack.c.bf16 %v631, %v631
    %v633 = vld [vmem:[#allocation7] sm:$0xf]
    %v634 = vld [vmem:[#allocation7 + $0x4] sm:$0xf]
    %v635 = vld [vmem:[#allocation7 + $0x8] sm:$0xf]
    %v636 = vld [vmem:[#allocation7 + $0xc] sm:$0xf]
    %v637 = vld [vmem:[#allocation7 + $0x10] sm:$0xf]
    %v638 = vld [vmem:[#allocation7 + $0x14] sm:$0xf]
    %v639 = vld [vmem:[#allocation7 + $0x18] sm:$0xf]
    %v640 = vld [vmem:[#allocation7 + $0x1c] sm:$0xf]
    %v641 = vld [vmem:[#allocation7 + $0x20] sm:$0xf]
    %v642 = vld [vmem:[#allocation7 + $0x24] sm:$0xf]
    %v643 = vld [vmem:[#allocation7 + $0x28] sm:$0xf]
    %v644 = vld [vmem:[#allocation7 + $0x2c] sm:$0xf]
    %v645 = vld [vmem:[#allocation7 + $0x30] sm:$0xf]
    %v646 = vld [vmem:[#allocation7 + $0x34] sm:$0xf]
    %v647 = vld [vmem:[#allocation7 + $0x38] sm:$0xf]
    %v648 = vld [vmem:[#allocation7 + $0x3c] sm:$0xf]
    %v665 = vunpack.c.l.b16 %v633
    %v666 = vunpack.c.l.b16 %v634
    %v667 = vunpack.c.l.b16 %v635
    %v668 = vunpack.c.l.b16 %v636
    %v669 = vunpack.c.l.b16 %v637
    %v670 = vunpack.c.l.b16 %v638
    %v671 = vunpack.c.l.b16 %v639
    %v672 = vunpack.c.l.b16 %v640
    %v673 = vunpack.c.l.b16 %v641
    %v674 = vunpack.c.l.b16 %v642
    %v675 = vunpack.c.l.b16 %v643
    %v676 = vunpack.c.l.b16 %v644
    %v677 = vunpack.c.l.b16 %v645
    %v678 = vunpack.c.l.b16 %v646
    %v679 = vunpack.c.l.b16 %v647
    %v680 = vunpack.c.l.b16 %v648
    %v681 = vpack.c.b16 %v666, %v665
    %v682 = vpack.c.b16 %v668, %v667
    %v683 = vpack.c.b16 %v670, %v669
    %v684 = vpack.c.b16 %v672, %v671
    %v685 = vpack.c.b16 %v674, %v673
    %v686 = vpack.c.b16 %v676, %v675
    %v687 = vpack.c.b16 %v678, %v677
    %v688 = vpack.c.b16 %v680, %v679
    %697 = vmatprep.subr.bf16.mxu0 0
    %698 = vmatpush1.bf16.msra.mxu0 %v681
    %699 = vmatprep.subr.bf16.mxu0 0
    %700 = vmatpush1.bf16.msra.mxu0 %v682
    %701 = vmatprep.subr.bf16.mxu0 0
    %702 = vmatpush1.bf16.msra.mxu0 %v683
    %703 = vmatprep.subr.bf16.mxu0 0
    %704 = vmatpush1.bf16.msra.mxu0 %v684
    %705 = vmatprep.subr.bf16.mxu0 0
    %706 = vmatpush1.bf16.msra.mxu0 %v685
    %707 = vmatprep.subr.bf16.mxu0 0
    %708 = vmatpush1.bf16.msra.mxu0 %v686
    %709 = vmatprep.subr.bf16.mxu0 0
    %710 = vmatpush1.bf16.msra.mxu0 %v687
    %711 = vmatprep.subr.bf16.mxu0 0
    %712 = vmatpush1.bf16.msra.mxu0 %v688
    %713 = vmatprep.subr.bf16.mxu0 0
    %714 = vmatpush1.bf16.msra.mxu0 0
    %715 = vmatprep.subr.bf16.mxu0 0
    %716 = vmatpush1.bf16.msra.mxu0 0
    %717 = vmatprep.subr.bf16.mxu0 0
    %718 = vmatpush1.bf16.msra.mxu0 0
    %719 = vmatprep.subr.bf16.mxu0 0
    %720 = vmatpush1.bf16.msra.mxu0 0
    %721 = vmatprep.subr.bf16.mxu0 0
    %722 = vmatpush1.bf16.msra.mxu0 0
    %723 = vmatprep.subr.bf16.mxu0 0
    %724 = vmatpush1.bf16.msra.mxu0 0
    %725 = vmatprep.subr.bf16.mxu0 0
    %726 = vmatpush1.bf16.msra.mxu0 0
    %727 = vmatprep.subr.bf16.mxu0 0
    %728 = vmatpush1.bf16.msra.mxu0 0
    %729 = vmatprep.mubr.bf16.mxu0 0
    %730 = vmatmul.mubr.bf16.gmra.mrb[0].mxu0 %v632
    %v731 = vpop.f32.mrb[0].mxu0
    %v732 = vadd.f32 0.0, %v731
    %v733 = vpop.f32.mrb[0].mxu0
    %v734 = vpop.f32.mrb[0].mxu0
    %v735 = vpop.f32.mrb[0].mxu0
    %736 = vdwg.mxu0
    %v737 = vmax.f32 %v732, 0.0
    %v738 = vpack.c.bf16 %v737, %v737
    %v739 = vld [vmem:[#allocation8] sm:$0xf]
    %v740 = vld [vmem:[#allocation8 + $0x4] sm:$0xf]
    %v741 = vld [vmem:[#allocation8 + $0x8] sm:$0xf]
    %v742 = vld [vmem:[#allocation8 + $0xc] sm:$0xf]
    %v743 = vld [vmem:[#allocation8 + $0x10] sm:$0xf]
    %v744 = vld [vmem:[#allocation8 + $0x14] sm:$0xf]
    %v745 = vld [vmem:[#allocation8 + $0x18] sm:$0xf]
    %v746 = vld [vmem:[#allocation8 + $0x1c] sm:$0xf]
    %v747 = vld [vmem:[#allocation8 + $0x20] sm:$0xf]
    %v748 = vld [vmem:[#allocation8 + $0x24] sm:$0xf]
    %v749 = vld [vmem:[#allocation8 + $0x28] sm:$0xf]
    %v750 = vld [vmem:[#allocation8 + $0x2c] sm:$0xf]
    %v751 = vld [vmem:[#allocation8 + $0x30] sm:$0xf]
    %v752 = vld [vmem:[#allocation8 + $0x34] sm:$0xf]
    %v753 = vld [vmem:[#allocation8 + $0x38] sm:$0xf]
    %v754 = vld [vmem:[#allocation8 + $0x3c] sm:$0xf]
    %v771 = vunpack.c.l.b16 %v739
    %v772 = vunpack.c.l.b16 %v740
    %v773 = vunpack.c.l.b16 %v741
    %v774 = vunpack.c.l.b16 %v742
    %v775 = vunpack.c.l.b16 %v743
    %v776 = vunpack.c.l.b16 %v744
    %v777 = vunpack.c.l.b16 %v745
    %v778 = vunpack.c.l.b16 %v746
    %v779 = vunpack.c.l.b16 %v747
    %v780 = vunpack.c.l.b16 %v748
    %v781 = vunpack.c.l.b16 %v749
    %v782 = vunpack.c.l.b16 %v750
    %v783 = vunpack.c.l.b16 %v751
    %v784 = vunpack.c.l.b16 %v752
    %v785 = vunpack.c.l.b16 %v753
    %v786 = vunpack.c.l.b16 %v754
    %v787 = vpack.c.b16 %v772, %v771
    %v788 = vpack.c.b16 %v774, %v773
    %v789 = vpack.c.b16 %v776, %v775
    %v790 = vpack.c.b16 %v778, %v777
    %v791 = vpack.c.b16 %v780, %v779
    %v792 = vpack.c.b16 %v782, %v781
    %v793 = vpack.c.b16 %v784, %v783
    %v794 = vpack.c.b16 %v786, %v785
    %803 = vmatprep.subr.bf16.mxu0 0
    %804 = vmatpush1.bf16.msra.mxu0 %v787
    %805 = vmatprep.subr.bf16.mxu0 0
    %806 = vmatpush1.bf16.msra.mxu0 %v788
    %807 = vmatprep.subr.bf16.mxu0 0
    %808 = vmatpush1.bf16.msra.mxu0 %v789
    %809 = vmatprep.subr.bf16.mxu0 0
    %810 = vmatpush1.bf16.msra.mxu0 %v790
    %811 = vmatprep.subr.bf16.mxu0 0
    %812 = vmatpush1.bf16.msra.mxu0 %v791
    %813 = vmatprep.subr.bf16.mxu0 0
    %814 = vmatpush1.bf16.msra.mxu0 %v792
    %815 = vmatprep.subr.bf16.mxu0 0
    %816 = vmatpush1.bf16.msra.mxu0 %v793
    %817 = vmatprep.subr.bf16.mxu0 0
    %818 = vmatpush1.bf16.msra.mxu0 %v794
    %819 = vmatprep.subr.bf16.mxu0 0
    %820 = vmatpush1.bf16.msra.mxu0 0
    %821 = vmatprep.subr.bf16.mxu0 0
    %822 = vmatpush1.bf16.msra.mxu0 0
    %823 = vmatprep.subr.bf16.mxu0 0
    %824 = vmatpush1.bf16.msra.mxu0 0
    %825 = vmatprep.subr.bf16.mxu0 0
    %826 = vmatpush1.bf16.msra.mxu0 0
    %827 = vmatprep.subr.bf16.mxu0 0
    %828 = vmatpush1.bf16.msra.mxu0 0
    %829 = vmatprep.subr.bf16.mxu0 0
    %830 = vmatpush1.bf16.msra.mxu0 0
    %831 = vmatprep.subr.bf16.mxu0 0
    %832 = vmatpush1.bf16.msra.mxu0 0
    %833 = vmatprep.subr.bf16.mxu0 0
    %834 = vmatpush1.bf16.msra.mxu0 0
    %835 = vmatprep.mubr.bf16.mxu0 0
    %836 = vmatmul.mubr.bf16.gmra.mrb[0].mxu0 %v738
    %v837 = vpop.f32.mrb[0].mxu0
    %v838 = vadd.f32 0.0, %v837
    %v839 = vpop.f32.mrb[0].mxu0
    %v840 = vpop.f32.mrb[0].mxu0
    %v841 = vpop.f32.mrb[0].mxu0
    %842 = vdwg.mxu0
    %843 = vst [vmem:[#allocation10] sm:$0x3] %v838
    // Predicated region
    $region34: #{tpu_custom_call.1} parent=1 // pred_check
      _
    $region35: #{tpu_custom_call.1} parent=1 // pred_check_branch
      %845 = sbr.rel (0) target = $region37
    $region36: #{tpu_custom_call.1} parent=1 // pred_region
      %s847 = ssub.s32 32, 32
      %848 = vsyncadd [#allocation4], %s847
      %s850 = sshll.u32 [#allocation10], 4
      %s851 = int_to_ptr.vmem [resolvable:$true] %s850
      %853 = dma.vmem_to_hbm [thread:$0]  %s851, 32, %s4, [#allocation4]
    $region37: #{tpu_custom_call.1} parent=1 // pred_fallthru
      _
    // Predicated region
    $region38: #{tpu_custom_call.1} parent=1 // pred_check
      _
    $region39: #{tpu_custom_call.1} parent=1 // pred_check_branch
      %855 = sbr.rel (0) target = $region41
    $region40: #{tpu_custom_call.1} parent=1 // pred_region
      %856 = dma.done [#allocation4], 32
    $region41: #{tpu_custom_call.1} parent=1 // pred_fallthru
      _
    %857 = vsyncpa [#allocation3], 1
    %858 = vsyncpa [#allocation6], 1
    %859 = vsyncpa [#allocation9], 1
    %860 = vsyncpa [#allocation4], 1

</llo_original>
